<compile_context>
chip_gen: v7x
topology: tpu7x:2x2x1
jax: 0.10.0
libtpu: 0.0.40
codegen_flags: <defaults>
</compile_context>

<pallas_src>
import functools

import jax
import jax.numpy as jnp
from jax.experimental import pallas as pl
from jax.experimental.pallas import tpu as pltpu


def _double_conv_kernel(x_ref, mask_ref, w1_ref, w2_ref, s1_ref, t1_ref,
                        s2_ref, t2_ref, o_ref, stack_ref, *,
                        NB, H, W, C_in, C_mid, C_out):
    """Fused (conv3x3 -> BN(eval) -> ReLU) x 2 for a block of NB images.

    x_ref:    (NB, C_in, S)        flattened images, S = H*W on lanes
    mask_ref: (9, S)               per-tap zero-padding boundary masks (0/1)
    w1_ref:   (C_mid, 9*C_in)      im2col weights, column = k*C_in + ci
    w2_ref:   (C_out, 9*C_mid)
    s*/t*:    (C, 1) f32           folded BN scale / shift (conv bias included)
    o_ref:    (NB, C_out, S)
    stack_ref:(9*max(C_in,C_mid), S) VMEM scratch for the im2col stack
    """
    S = H * W
    cdt = stack_ref.dtype

    # Tap order matches weight column order: k = (dh+1)*3 + (dw+1).
    offsets = [(dh, dw) for dh in (-1, 0, 1) for dw in (-1, 0, 1)]

    # Load the 9 (1, S) boundary-mask rows once; reused by both convs and all
    # NB images (precomputed host-side -> no iota/compare chains in-kernel).
    masks = [mask_ref[pl.ds(k, 1), :] for k in range(9)]

    # Hoist invariant loads out of the per-image loop.
    w1 = w1_ref[...]
    w2 = w2_ref[...]
    s1 = s1_ref[...]
    t1 = t1_ref[...]
    s2 = s2_ref[...]
    t2 = t2_ref[...]

    def conv3x3(inp, w, c_in):
        """inp: (c_in, S) in cdt; w: (c_out, 9*c_in). Returns (c_out, S) f32."""
        # Build the sublane-stacked im2col buffer in VMEM scratch.
        for k, (dh, dw) in enumerate(offsets):
            s = dh * W + dw
            if s == 0:
                tap = inp                      # center tap: mask is all ones
            else:
                # shifted[p] = inp[(p + s) mod S]; any wrap-around / cross-row
                # source is zeroed by the boundary mask.
                shifted = pltpu.roll(inp, shift=(-s) % S, axis=1)
                tap = shifted * masks[k]
            stack_ref[pl.ds(k * c_in, c_in), :] = tap
        cols = stack_ref[pl.ds(0, 9 * c_in), :]
        # One MXU matmul with K = 9*c_in (f32 accumulation).
        return jnp.dot(w, cols, preferred_element_type=jnp.float32)

    for b in range(NB):
        x = x_ref[b]                                     # (C_in, S)
        # conv1 -> BN1 -> ReLU
        y1 = conv3x3(x, w1, C_in)                        # (C_mid, S) f32
        y1 = jnp.maximum(y1 * s1 + t1, 0.0).astype(cdt)
        # conv2 -> BN2 -> ReLU
        y2 = conv3x3(y1, w2, C_mid)                      # (C_out, S) f32
        y2 = jnp.maximum(y2 * s2 + t2, 0.0)
        o_ref[b] = y2.astype(o_ref.dtype)


def _round_up8(c):
    return ((c + 7) // 8) * 8


def double_conv_forward(x, w1, b1, bn1, w2, b2, bn2, *, eps=1e-5,
                        io_dtype=None):
    """Forward pass of double_conv (eval-mode BatchNorm).

    x:   (N, C_in, H, W)   NCHW, like PyTorch
    w1:  (C_mid, C_in, 3, 3),  b1: (C_mid,)
    w2:  (C_out, C_mid, 3, 3), b2: (C_out,)
    bn1/bn2: tuples (gamma, beta, running_mean, running_var), each (C,)
    io_dtype: dtype used for HBM-resident activations/weights/output
              (e.g. jnp.bfloat16 for the memory-bound fast path).
              Accumulation is always f32. Default: x.dtype.
    returns (N, C_out, H, W) in io_dtype (or x.dtype).
    """
    N, C_in, H, W = x.shape
    C_mid = w1.shape[0]
    C_out = w2.shape[0]
    S = H * W
    dtype = jnp.dtype(io_dtype) if io_dtype is not None else jnp.dtype(x.dtype)

    # Sublane-align channel axes (zero padding; padded weights/scale/shift are
    # zero so padded channels contribute exactly 0 and stay 0 after ReLU).
    C_in_p, C_mid_p, C_out_p = _round_up8(C_in), _round_up8(C_mid), _round_up8(C_out)
    C_big = max(C_in_p, C_mid_p)

    # Fold conv bias + eval-mode BN into per-channel scale/shift (f32).
    def fold(gamma, beta, mean, var, bias, c_pad):
        scale = gamma / jnp.sqrt(var + eps)
        shift = beta + scale * (bias - mean)
        scale = jnp.pad(scale.astype(jnp.float32), (0, c_pad - scale.shape[0]))
        shift = jnp.pad(shift.astype(jnp.float32), (0, c_pad - shift.shape[0]))
        return scale.reshape(-1, 1), shift.reshape(-1, 1)

    s1, t1 = fold(*bn1, b1, C_mid_p)
    s2, t2 = fold(*bn2, b2, C_out_p)

    # Weights -> im2col 2D form (C_out_p, 9*C_in_p), column = k*C_in_p + ci,
    # with k = kh*3 + kw (matches the tap/stack ordering in the kernel).
    def prep_w(w, c_out_p, c_in_p):
        c_out_, c_in_ = w.shape[0], w.shape[1]
        w = jnp.pad(w, ((0, c_out_p - c_out_), (0, c_in_p - c_in_),
                        (0, 0), (0, 0)))
        w = w.reshape(c_out_p, c_in_p, 9)
        w = jnp.transpose(w, (0, 2, 1)).reshape(c_out_p, 9 * c_in_p)
        return w.astype(dtype)

    w1_2d = prep_w(w1, C_mid_p, C_in_p)
    w2_2d = prep_w(w2, C_out_p, C_mid_p)

    # x: pad channels, put spatial on lanes (free reshape, no transpose).
    x3 = jnp.pad(x, ((0, 0), (0, C_in_p - C_in), (0, 0), (0, 0)))
    x3 = x3.reshape(N, C_in_p, S).astype(dtype)

    # Precompute the 9 zero-padding boundary masks host-side: mask[k, p] = 1
    # iff the tap (dh, dw) of pixel p stays inside the image.
    pos = jnp.arange(S)
    hh, ww = pos // W, pos % W
    mask_rows = []
    for dh in (-1, 0, 1):
        for dw in (-1, 0, 1):
            mask_rows.append((hh + dh >= 0) & (hh + dh < H) &
                             (ww + dw >= 0) & (ww + dw < W))
    masks = jnp.stack(mask_rows).astype(dtype)          # (9, S)

    # Batch-block size: amortize per-grid-step overhead over NB images, but
    # keep the grid length >= 2 (v7x megacore) and the double-buffered
    # per-step working set conservative.
    bytes_per_img = (C_in_p + C_out_p) * S * jnp.dtype(dtype).itemsize
    NB = 1
    for nb in range(1, min(N, 8) + 1):
        if N % nb:
            continue
        if N >= 2 and N // nb < 2:
            continue                      # keep >= 2 grid steps for 2 TCs
        if 2 * nb * bytes_per_img > (8 << 20):
            continue
        NB = nb
    grid = (N // NB,)

    kernel = functools.partial(_double_conv_kernel, NB=NB, H=H, W=W,
                               C_in=C_in_p, C_mid=C_mid_p, C_out=C_out_p)

    out = pl.pallas_call(
        kernel,
        out_shape=jax.ShapeDtypeStruct((N, C_out_p, S), dtype),
        grid_spec=pltpu.PrefetchScalarGridSpec(
            num_scalar_prefetch=0,
            grid=grid,
            in_specs=[
                pl.BlockSpec((NB, C_in_p, S), lambda i: (i, 0, 0)),
                pl.BlockSpec((9, S), lambda i: (0, 0)),
                pl.BlockSpec((C_mid_p, 9 * C_in_p), lambda i: (0, 0)),
                pl.BlockSpec((C_out_p, 9 * C_mid_p), lambda i: (0, 0)),
                pl.BlockSpec((C_mid_p, 1), lambda i: (0, 0)),
                pl.BlockSpec((C_mid_p, 1), lambda i: (0, 0)),
                pl.BlockSpec((C_out_p, 1), lambda i: (0, 0)),
                pl.BlockSpec((C_out_p, 1), lambda i: (0, 0)),
            ],
            out_specs=pl.BlockSpec((NB, C_out_p, S), lambda i: (i, 0, 0)),
            scratch_shapes=[pltpu.VMEM((9 * C_big, S), dtype)],
        ),
        compiler_params=pltpu.CompilerParams(
            dimension_semantics=("parallel",),
        ),
    )(x3, masks, w1_2d, w2_2d, s1, t1, s2, t2)

    return out[:, :C_out, :].reshape(N, C_out, H, W)


if __name__ == "__main__":
    # double_conv(in_ch=4, out_ch=8), small shapes (N=4 so the batch-blocked
    # path NB=2, grid=(2,) is exercised).
    in_ch, out_ch = 4, 8
    N, H, W = 4, 16, 16
    eps = 1e-5

    key = jax.random.PRNGKey(0)
    keys = jax.random.split(key, 7)

    x = jax.random.normal(keys[0], (N, in_ch, H, W), dtype=jnp.float32)

    def conv_init(kw_, kb_, c_out, c_in):
        bound = 1.0 / (c_in * 9) ** 0.5
        w = jax.random.uniform(kw_, (c_out, c_in, 3, 3),
                               minval=-bound, maxval=bound, dtype=jnp.float32)
        b = jax.random.uniform(kb_, (c_out,),
                               minval=-bound, maxval=bound, dtype=jnp.float32)
        return w, b

    w1, b1 = conv_init(keys[1], keys[2], out_ch, in_ch)
    w2, b2 = conv_init(keys[3], keys[4], out_ch, out_ch)

    def bn_init(k, c):
        k1, k2, k3, k4 = jax.random.split(k, 4)
        gamma = jax.random.uniform(k1, (c,), minval=0.5, maxval=1.5,
                                   dtype=jnp.float32)
        beta = jax.random.uniform(k2, (c,), minval=-0.5, maxval=0.5,
                                  dtype=jnp.float32)
        mean = jax.random.uniform(k3, (c,), minval=-0.5, maxval=0.5,
                                  dtype=jnp.float32)
        var = jax.random.uniform(k4, (c,), minval=0.5, maxval=1.5,
                                 dtype=jnp.float32)
        return gamma, beta, mean, var

    bn1 = bn_init(keys[5], out_ch)
    bn2 = bn_init(keys[6], out_ch)

    # f32 path (bit-for-bit semantics of the PyTorch module, eval-mode BN).
    y = double_conv_forward(x, w1, b1, bn1, w2, b2, bn2, eps=eps)
    y = jax.block_until_ready(y)

    # Pure-JAX reference: conv3x3 (pad=1) -> BN(eval) -> ReLU, twice.
    def conv_bn_relu_ref(inp, w, b, bn):
        gamma, beta, mean, var = bn
        r = jax.lax.conv_general_dilated(
            inp, w, window_strides=(1, 1), padding=((1, 1), (1, 1)),
            dimension_numbers=("NCHW", "OIHW", "NCHW"),
            precision=jax.lax.Precision.HIGHEST)
        r = r + b.reshape(1, -1, 1, 1)
        r = ((r - mean.reshape(1, -1, 1, 1))
             * (gamma.reshape(1, -1, 1, 1)
                / jnp.sqrt(var.reshape(1, -1, 1, 1) + eps))
             + beta.reshape(1, -1, 1, 1))
        return jnp.maximum(r, 0.0)

    ref = conv_bn_relu_ref(conv_bn_relu_ref(x, w1, b1, bn1), w2, b2, bn2)

    assert y.shape == (N, out_ch, H, W), y.shape
    assert jnp.allclose(y, ref, atol=1e-3, rtol=1e-3), \
        float(jnp.max(jnp.abs(y - ref)))

    # bf16 fast path (memory-bound win): loose sanity check vs f32 reference.
    y_bf = double_conv_forward(x, w1, b1, bn1, w2, b2, bn2, eps=eps,
                               io_dtype=jnp.bfloat16)
    y_bf = jax.block_until_ready(y_bf)
    assert y_bf.shape == (N, out_ch, H, W), y_bf.shape
    assert y_bf.dtype == jnp.bfloat16, y_bf.dtype
    assert jnp.allclose(y_bf.astype(jnp.float32), ref, atol=0.25, rtol=0.1), \
        float(jnp.max(jnp.abs(y_bf.astype(jnp.float32) - ref)))

    print("KERNEL_OK")
</pallas_src>

<mosaic_0001>
module attributes {stable_mosaic.version = 11 : i64} {
  func.func @_double_conv_kernel(%arg0: i32, %arg1: memref<2x8x256xf32, #tpu.memory_space<vmem>>, %arg2: memref<9x256xf32, #tpu.memory_space<vmem>>, %arg3: memref<8x72xf32, #tpu.memory_space<vmem>>, %arg4: memref<8x72xf32, #tpu.memory_space<vmem>>, %arg5: memref<8x1xf32, #tpu.memory_space<vmem>>, %arg6: memref<8x1xf32, #tpu.memory_space<vmem>>, %arg7: memref<8x1xf32, #tpu.memory_space<vmem>>, %arg8: memref<8x1xf32, #tpu.memory_space<vmem>>, %arg9: memref<2x8x256xf32, #tpu.memory_space<vmem>>, %arg10: memref<72x256xf32, #tpu.memory_space<vmem>>) attributes {dimension_semantics = [#tpu.dimension_semantics<parallel>], iteration_bounds = array<i64: 2>, scalar_prefetch = 0 : i64, scratch_operands = 1 : i64, tpu.core_type = #tpu.core_type<tc>, window_params = [{transform_indices = @transform_0, window_bounds = array<i64: 2, 8, 256>}, {pipeline_mode = #tpu.pipeline_mode<synchronous>, transform_indices = @transform_1, window_bounds = array<i64: 9, 256>}, {pipeline_mode = #tpu.pipeline_mode<synchronous>, transform_indices = @transform_2, window_bounds = array<i64: 8, 72>}, {pipeline_mode = #tpu.pipeline_mode<synchronous>, transform_indices = @transform_3, window_bounds = array<i64: 8, 72>}, {pipeline_mode = #tpu.pipeline_mode<synchronous>, transform_indices = @transform_4, window_bounds = array<i64: 8, 1>}, {pipeline_mode = #tpu.pipeline_mode<synchronous>, transform_indices = @transform_5, window_bounds = array<i64: 8, 1>}, {pipeline_mode = #tpu.pipeline_mode<synchronous>, transform_indices = @transform_6, window_bounds = array<i64: 8, 1>}, {pipeline_mode = #tpu.pipeline_mode<synchronous>, transform_indices = @transform_7, window_bounds = array<i64: 8, 1>}, {transform_indices = @transform_8, window_bounds = array<i64: 2, 8, 256>}]} {
    %c0 = arith.constant 0 : index
    %c0_0 = arith.constant 0 : index
    %0 = vector.load %arg2[%c0, %c0_0] : memref<9x256xf32, #tpu.memory_space<vmem>>, vector<1x256xf32>
    %c1 = arith.constant 1 : index
    %c0_1 = arith.constant 0 : index
    %1 = vector.load %arg2[%c1, %c0_1] : memref<9x256xf32, #tpu.memory_space<vmem>>, vector<1x256xf32>
    %c2 = arith.constant 2 : index
    %c0_2 = arith.constant 0 : index
    %2 = vector.load %arg2[%c2, %c0_2] : memref<9x256xf32, #tpu.memory_space<vmem>>, vector<1x256xf32>
    %c3 = arith.constant 3 : index
    %c0_3 = arith.constant 0 : index
    %3 = vector.load %arg2[%c3, %c0_3] : memref<9x256xf32, #tpu.memory_space<vmem>>, vector<1x256xf32>
    %c5 = arith.constant 5 : index
    %c0_4 = arith.constant 0 : index
    %4 = vector.load %arg2[%c5, %c0_4] : memref<9x256xf32, #tpu.memory_space<vmem>>, vector<1x256xf32>
    %c6 = arith.constant 6 : index
    %c0_5 = arith.constant 0 : index
    %5 = vector.load %arg2[%c6, %c0_5] : memref<9x256xf32, #tpu.memory_space<vmem>>, vector<1x256xf32>
    %c7 = arith.constant 7 : index
    %c0_6 = arith.constant 0 : index
    %6 = vector.load %arg2[%c7, %c0_6] : memref<9x256xf32, #tpu.memory_space<vmem>>, vector<1x256xf32>
    %c8 = arith.constant 8 : index
    %c0_7 = arith.constant 0 : index
    %7 = vector.load %arg2[%c8, %c0_7] : memref<9x256xf32, #tpu.memory_space<vmem>>, vector<1x256xf32>
    %c0_8 = arith.constant 0 : index
    %c0_9 = arith.constant 0 : index
    %8 = vector.load %arg3[%c0_8, %c0_9] : memref<8x72xf32, #tpu.memory_space<vmem>>, vector<8x72xf32>
    %c0_10 = arith.constant 0 : index
    %c0_11 = arith.constant 0 : index
    %9 = vector.load %arg4[%c0_10, %c0_11] : memref<8x72xf32, #tpu.memory_space<vmem>>, vector<8x72xf32>
    %c0_12 = arith.constant 0 : index
    %c0_13 = arith.constant 0 : index
    %10 = vector.load %arg5[%c0_12, %c0_13] : memref<8x1xf32, #tpu.memory_space<vmem>>, vector<8x1xf32>
    %c0_14 = arith.constant 0 : index
    %c0_15 = arith.constant 0 : index
    %11 = vector.load %arg6[%c0_14, %c0_15] : memref<8x1xf32, #tpu.memory_space<vmem>>, vector<8x1xf32>
    %c0_16 = arith.constant 0 : index
    %c0_17 = arith.constant 0 : index
    %12 = vector.load %arg7[%c0_16, %c0_17] : memref<8x1xf32, #tpu.memory_space<vmem>>, vector<8x1xf32>
    %c0_18 = arith.constant 0 : index
    %c0_19 = arith.constant 0 : index
    %13 = vector.load %arg8[%c0_18, %c0_19] : memref<8x1xf32, #tpu.memory_space<vmem>>, vector<8x1xf32>
    %c0_20 = arith.constant 0 : index
    %c0_21 = arith.constant 0 : index
    %c0_22 = arith.constant 0 : index
    %14 = vector.load %arg1[%c0_20, %c0_21, %c0_22] : memref<2x8x256xf32, #tpu.memory_space<vmem>>, vector<1x8x256xf32>
    %15 = vector.shape_cast %14 : vector<1x8x256xf32> to vector<8x256xf32>
    %c17_i32 = arith.constant 17 : i32
    %16 = tpu.dynamic_rotate %15 by %c17_i32 dim 1 : vector<8x256xf32>, i32 -> vector<8x256xf32>
    %17 = vector.broadcast %0 : vector<1x256xf32> to vector<8x256xf32>
    %18 = arith.mulf %16, %17 : vector<8x256xf32>
    %c0_23 = arith.constant 0 : index
    %c0_24 = arith.constant 0 : index
    %19 = vector.load %arg10[%c0_23, %c0_24] : memref<72x256xf32, #tpu.memory_space<vmem>>, vector<8x256xf32>
    tpu.vector_store %arg10[%c0_23, %c0_24], %18 {strides = array<i32>} : memref<72x256xf32, #tpu.memory_space<vmem>>, vector<8x256xf32>,
    %c16_i32 = arith.constant 16 : i32
    %20 = tpu.dynamic_rotate %15 by %c16_i32 dim 1 : vector<8x256xf32>, i32 -> vector<8x256xf32>
    %21 = vector.broadcast %1 : vector<1x256xf32> to vector<8x256xf32>
    %22 = arith.mulf %20, %21 : vector<8x256xf32>
    %c8_25 = arith.constant 8 : index
    %c0_26 = arith.constant 0 : index
    %23 = vector.load %arg10[%c8_25, %c0_26] : memref<72x256xf32, #tpu.memory_space<vmem>>, vector<8x256xf32>
    tpu.vector_store %arg10[%c8_25, %c0_26], %22 {strides = array<i32>} : memref<72x256xf32, #tpu.memory_space<vmem>>, vector<8x256xf32>,
    %c15_i32 = arith.constant 15 : i32
    %24 = tpu.dynamic_rotate %15 by %c15_i32 dim 1 : vector<8x256xf32>, i32 -> vector<8x256xf32>
    %25 = vector.broadcast %2 : vector<1x256xf32> to vector<8x256xf32>
    %26 = arith.mulf %24, %25 : vector<8x256xf32>
    %c16 = arith.constant 16 : index
    %c0_27 = arith.constant 0 : index
    %27 = vector.load %arg10[%c16, %c0_27] : memref<72x256xf32, #tpu.memory_space<vmem>>, vector<8x256xf32>
    tpu.vector_store %arg10[%c16, %c0_27], %26 {strides = array<i32>} : memref<72x256xf32, #tpu.memory_space<vmem>>, vector<8x256xf32>,
    %c1_i32 = arith.constant 1 : i32
    %28 = tpu.dynamic_rotate %15 by %c1_i32 dim 1 : vector<8x256xf32>, i32 -> vector<8x256xf32>
    %29 = vector.broadcast %3 : vector<1x256xf32> to vector<8x256xf32>
    %30 = arith.mulf %28, %29 : vector<8x256xf32>
    %c24 = arith.constant 24 : index
    %c0_28 = arith.constant 0 : index
    %31 = vector.load %arg10[%c24, %c0_28] : memref<72x256xf32, #tpu.memory_space<vmem>>, vector<8x256xf32>
    tpu.vector_store %arg10[%c24, %c0_28], %30 {strides = array<i32>} : memref<72x256xf32, #tpu.memory_space<vmem>>, vector<8x256xf32>,
    %c32 = arith.constant 32 : index
    %c0_29 = arith.constant 0 : index
    %32 = vector.load %arg10[%c32, %c0_29] : memref<72x256xf32, #tpu.memory_space<vmem>>, vector<8x256xf32>
    tpu.vector_store %arg10[%c32, %c0_29], %15 {strides = array<i32>} : memref<72x256xf32, #tpu.memory_space<vmem>>, vector<8x256xf32>,
    %c255_i32 = arith.constant 255 : i32
    %33 = tpu.dynamic_rotate %15 by %c255_i32 dim 1 : vector<8x256xf32>, i32 -> vector<8x256xf32>
    %34 = vector.broadcast %4 : vector<1x256xf32> to vector<8x256xf32>
    %35 = arith.mulf %33, %34 : vector<8x256xf32>
    %c40 = arith.constant 40 : index
    %c0_30 = arith.constant 0 : index
    %36 = vector.load %arg10[%c40, %c0_30] : memref<72x256xf32, #tpu.memory_space<vmem>>, vector<8x256xf32>
    tpu.vector_store %arg10[%c40, %c0_30], %35 {strides = array<i32>} : memref<72x256xf32, #tpu.memory_space<vmem>>, vector<8x256xf32>,
    %c241_i32 = arith.constant 241 : i32
    %37 = tpu.dynamic_rotate %15 by %c241_i32 dim 1 : vector<8x256xf32>, i32 -> vector<8x256xf32>
    %38 = vector.broadcast %5 : vector<1x256xf32> to vector<8x256xf32>
    %39 = arith.mulf %37, %38 : vector<8x256xf32>
    %c48 = arith.constant 48 : index
    %c0_31 = arith.constant 0 : index
    %40 = vector.load %arg10[%c48, %c0_31] : memref<72x256xf32, #tpu.memory_space<vmem>>, vector<8x256xf32>
    tpu.vector_store %arg10[%c48, %c0_31], %39 {strides = array<i32>} : memref<72x256xf32, #tpu.memory_space<vmem>>, vector<8x256xf32>,
    %c240_i32 = arith.constant 240 : i32
    %41 = tpu.dynamic_rotate %15 by %c240_i32 dim 1 : vector<8x256xf32>, i32 -> vector<8x256xf32>
    %42 = vector.broadcast %6 : vector<1x256xf32> to vector<8x256xf32>
    %43 = arith.mulf %41, %42 : vector<8x256xf32>
    %c56 = arith.constant 56 : index
    %c0_32 = arith.constant 0 : index
    %44 = vector.load %arg10[%c56, %c0_32] : memref<72x256xf32, #tpu.memory_space<vmem>>, vector<8x256xf32>
    tpu.vector_store %arg10[%c56, %c0_32], %43 {strides = array<i32>} : memref<72x256xf32, #tpu.memory_space<vmem>>, vector<8x256xf32>,
    %c239_i32 = arith.constant 239 : i32
    %45 = tpu.dynamic_rotate %15 by %c239_i32 dim 1 : vector<8x256xf32>, i32 -> vector<8x256xf32>
    %46 = vector.broadcast %7 : vector<1x256xf32> to vector<8x256xf32>
    %47 = arith.mulf %45, %46 : vector<8x256xf32>
    %c64 = arith.constant 64 : index
    %c0_33 = arith.constant 0 : index
    %48 = vector.load %arg10[%c64, %c0_33] : memref<72x256xf32, #tpu.memory_space<vmem>>, vector<8x256xf32>
    tpu.vector_store %arg10[%c64, %c0_33], %47 {strides = array<i32>} : memref<72x256xf32, #tpu.memory_space<vmem>>, vector<8x256xf32>,
    %c0_34 = arith.constant 0 : index
    %c0_35 = arith.constant 0 : index
    %49 = vector.load %arg10[%c0_34, %c0_35] : memref<72x256xf32, #tpu.memory_space<vmem>>, vector<72x256xf32>
    %cst = arith.constant dense<0.000000e+00> : vector<8x256xf32>
    %50 = tpu.matmul %8, %49, %cst {dimension_numbers = #tpu.dot_dimension_numbers<[1], [0], [0], [1], [0, 0, 1, 1], [], []>} : vector<8x72xf32>, vector<72x256xf32>, vector<8x256xf32> -> vector<8x256xf32>
    %51 = vector.broadcast %10 : vector<8x1xf32> to vector<8x256xf32>
    %52 = arith.mulf %50, %51 : vector<8x256xf32>
    %53 = vector.broadcast %11 : vector<8x1xf32> to vector<8x256xf32>
    %54 = arith.addf %52, %53 : vector<8x256xf32>
    %cst_36 = arith.constant 0.000000e+00 : f32
    %55 = vector.broadcast %cst_36 : f32 to vector<8x256xf32>
    %56 = arith.maximumf %54, %55 : vector<8x256xf32>
    %c17_i32_37 = arith.constant 17 : i32
    %57 = tpu.dynamic_rotate %56 by %c17_i32_37 dim 1 : vector<8x256xf32>, i32 -> vector<8x256xf32>
    %58 = vector.broadcast %0 : vector<1x256xf32> to vector<8x256xf32>
    %59 = arith.mulf %57, %58 : vector<8x256xf32>
    %c0_38 = arith.constant 0 : index
    %c0_39 = arith.constant 0 : index
    %60 = vector.load %arg10[%c0_38, %c0_39] : memref<72x256xf32, #tpu.memory_space<vmem>>, vector<8x256xf32>
    tpu.vector_store %arg10[%c0_38, %c0_39], %59 {strides = array<i32>} : memref<72x256xf32, #tpu.memory_space<vmem>>, vector<8x256xf32>,
    %c16_i32_40 = arith.constant 16 : i32
    %61 = tpu.dynamic_rotate %56 by %c16_i32_40 dim 1 : vector<8x256xf32>, i32 -> vector<8x256xf32>
    %62 = vector.broadcast %1 : vector<1x256xf32> to vector<8x256xf32>
    %63 = arith.mulf %61, %62 : vector<8x256xf32>
    %c8_41 = arith.constant 8 : index
    %c0_42 = arith.constant 0 : index
    %64 = vector.load %arg10[%c8_41, %c0_42] : memref<72x256xf32, #tpu.memory_space<vmem>>, vector<8x256xf32>
    tpu.vector_store %arg10[%c8_41, %c0_42], %63 {strides = array<i32>} : memref<72x256xf32, #tpu.memory_space<vmem>>, vector<8x256xf32>,
    %c15_i32_43 = arith.constant 15 : i32
    %65 = tpu.dynamic_rotate %56 by %c15_i32_43 dim 1 : vector<8x256xf32>, i32 -> vector<8x256xf32>
    %66 = vector.broadcast %2 : vector<1x256xf32> to vector<8x256xf32>
    %67 = arith.mulf %65, %66 : vector<8x256xf32>
    %c16_44 = arith.constant 16 : index
    %c0_45 = arith.constant 0 : index
    %68 = vector.load %arg10[%c16_44, %c0_45] : memref<72x256xf32, #tpu.memory_space<vmem>>, vector<8x256xf32>
    tpu.vector_store %arg10[%c16_44, %c0_45], %67 {strides = array<i32>} : memref<72x256xf32, #tpu.memory_space<vmem>>, vector<8x256xf32>,
    %c1_i32_46 = arith.constant 1 : i32
    %69 = tpu.dynamic_rotate %56 by %c1_i32_46 dim 1 : vector<8x256xf32>, i32 -> vector<8x256xf32>
    %70 = vector.broadcast %3 : vector<1x256xf32> to vector<8x256xf32>
    %71 = arith.mulf %69, %70 : vector<8x256xf32>
    %c24_47 = arith.constant 24 : index
    %c0_48 = arith.constant 0 : index
    %72 = vector.load %arg10[%c24_47, %c0_48] : memref<72x256xf32, #tpu.memory_space<vmem>>, vector<8x256xf32>
    tpu.vector_store %arg10[%c24_47, %c0_48], %71 {strides = array<i32>} : memref<72x256xf32, #tpu.memory_space<vmem>>, vector<8x256xf32>,
    %c32_49 = arith.constant 32 : index
    %c0_50 = arith.constant 0 : index
    %73 = vector.load %arg10[%c32_49, %c0_50] : memref<72x256xf32, #tpu.memory_space<vmem>>, vector<8x256xf32>
    tpu.vector_store %arg10[%c32_49, %c0_50], %56 {strides = array<i32>} : memref<72x256xf32, #tpu.memory_space<vmem>>, vector<8x256xf32>,
    %c255_i32_51 = arith.constant 255 : i32
    %74 = tpu.dynamic_rotate %56 by %c255_i32_51 dim 1 : vector<8x256xf32>, i32 -> vector<8x256xf32>
    %75 = vector.broadcast %4 : vector<1x256xf32> to vector<8x256xf32>
    %76 = arith.mulf %74, %75 : vector<8x256xf32>
    %c40_52 = arith.constant 40 : index
    %c0_53 = arith.constant 0 : index
    %77 = vector.load %arg10[%c40_52, %c0_53] : memref<72x256xf32, #tpu.memory_space<vmem>>, vector<8x256xf32>
    tpu.vector_store %arg10[%c40_52, %c0_53], %76 {strides = array<i32>} : memref<72x256xf32, #tpu.memory_space<vmem>>, vector<8x256xf32>,
    %c241_i32_54 = arith.constant 241 : i32
    %78 = tpu.dynamic_rotate %56 by %c241_i32_54 dim 1 : vector<8x256xf32>, i32 -> vector<8x256xf32>
    %79 = vector.broadcast %5 : vector<1x256xf32> to vector<8x256xf32>
    %80 = arith.mulf %78, %79 : vector<8x256xf32>
    %c48_55 = arith.constant 48 : index
    %c0_56 = arith.constant 0 : index
    %81 = vector.load %arg10[%c48_55, %c0_56] : memref<72x256xf32, #tpu.memory_space<vmem>>, vector<8x256xf32>
    tpu.vector_store %arg10[%c48_55, %c0_56], %80 {strides = array<i32>} : memref<72x256xf32, #tpu.memory_space<vmem>>, vector<8x256xf32>,
    %c240_i32_57 = arith.constant 240 : i32
    %82 = tpu.dynamic_rotate %56 by %c240_i32_57 dim 1 : vector<8x256xf32>, i32 -> vector<8x256xf32>
    %83 = vector.broadcast %6 : vector<1x256xf32> to vector<8x256xf32>
    %84 = arith.mulf %82, %83 : vector<8x256xf32>
    %c56_58 = arith.constant 56 : index
    %c0_59 = arith.constant 0 : index
    %85 = vector.load %arg10[%c56_58, %c0_59] : memref<72x256xf32, #tpu.memory_space<vmem>>, vector<8x256xf32>
    tpu.vector_store %arg10[%c56_58, %c0_59], %84 {strides = array<i32>} : memref<72x256xf32, #tpu.memory_space<vmem>>, vector<8x256xf32>,
    %c239_i32_60 = arith.constant 239 : i32
    %86 = tpu.dynamic_rotate %56 by %c239_i32_60 dim 1 : vector<8x256xf32>, i32 -> vector<8x256xf32>
    %87 = vector.broadcast %7 : vector<1x256xf32> to vector<8x256xf32>
    %88 = arith.mulf %86, %87 : vector<8x256xf32>
    %c64_61 = arith.constant 64 : index
    %c0_62 = arith.constant 0 : index
    %89 = vector.load %arg10[%c64_61, %c0_62] : memref<72x256xf32, #tpu.memory_space<vmem>>, vector<8x256xf32>
    tpu.vector_store %arg10[%c64_61, %c0_62], %88 {strides = array<i32>} : memref<72x256xf32, #tpu.memory_space<vmem>>, vector<8x256xf32>,
    %c0_63 = arith.constant 0 : index
    %c0_64 = arith.constant 0 : index
    %90 = vector.load %arg10[%c0_63, %c0_64] : memref<72x256xf32, #tpu.memory_space<vmem>>, vector<72x256xf32>
    %cst_65 = arith.constant dense<0.000000e+00> : vector<8x256xf32>
    %91 = tpu.matmul %9, %90, %cst_65 {dimension_numbers = #tpu.dot_dimension_numbers<[1], [0], [0], [1], [0, 0, 1, 1], [], []>} : vector<8x72xf32>, vector<72x256xf32>, vector<8x256xf32> -> vector<8x256xf32>
    %92 = vector.broadcast %12 : vector<8x1xf32> to vector<8x256xf32>
    %93 = arith.mulf %91, %92 : vector<8x256xf32>
    %94 = vector.broadcast %13 : vector<8x1xf32> to vector<8x256xf32>
    %95 = arith.addf %93, %94 : vector<8x256xf32>
    %cst_66 = arith.constant 0.000000e+00 : f32
    %96 = vector.broadcast %cst_66 : f32 to vector<8x256xf32>
    %97 = arith.maximumf %95, %96 : vector<8x256xf32>
    %c0_67 = arith.constant 0 : index
    %c0_68 = arith.constant 0 : index
    %c0_69 = arith.constant 0 : index
    %98 = vector.load %arg9[%c0_67, %c0_68, %c0_69] : memref<2x8x256xf32, #tpu.memory_space<vmem>>, vector<1x8x256xf32>
    %99 = vector.shape_cast %98 : vector<1x8x256xf32> to vector<8x256xf32>
    %100 = vector.shape_cast %97 : vector<8x256xf32> to vector<1x8x256xf32>
    tpu.vector_store %arg9[%c0_67, %c0_68, %c0_69], %100 {strides = array<i32>} : memref<2x8x256xf32, #tpu.memory_space<vmem>>, vector<1x8x256xf32>,
    %c1_70 = arith.constant 1 : index
    %c0_71 = arith.constant 0 : index
    %c0_72 = arith.constant 0 : index
    %101 = vector.load %arg1[%c1_70, %c0_71, %c0_72] : memref<2x8x256xf32, #tpu.memory_space<vmem>>, vector<1x8x256xf32>
    %102 = vector.shape_cast %101 : vector<1x8x256xf32> to vector<8x256xf32>
    %c17_i32_73 = arith.constant 17 : i32
    %103 = tpu.dynamic_rotate %102 by %c17_i32_73 dim 1 : vector<8x256xf32>, i32 -> vector<8x256xf32>
    %104 = vector.broadcast %0 : vector<1x256xf32> to vector<8x256xf32>
    %105 = arith.mulf %103, %104 : vector<8x256xf32>
    %c0_74 = arith.constant 0 : index
    %c0_75 = arith.constant 0 : index
    %106 = vector.load %arg10[%c0_74, %c0_75] : memref<72x256xf32, #tpu.memory_space<vmem>>, vector<8x256xf32>
    tpu.vector_store %arg10[%c0_74, %c0_75], %105 {strides = array<i32>} : memref<72x256xf32, #tpu.memory_space<vmem>>, vector<8x256xf32>,
    %c16_i32_76 = arith.constant 16 : i32
    %107 = tpu.dynamic_rotate %102 by %c16_i32_76 dim 1 : vector<8x256xf32>, i32 -> vector<8x256xf32>
    %108 = vector.broadcast %1 : vector<1x256xf32> to vector<8x256xf32>
    %109 = arith.mulf %107, %108 : vector<8x256xf32>
    %c8_77 = arith.constant 8 : index
    %c0_78 = arith.constant 0 : index
    %110 = vector.load %arg10[%c8_77, %c0_78] : memref<72x256xf32, #tpu.memory_space<vmem>>, vector<8x256xf32>
    tpu.vector_store %arg10[%c8_77, %c0_78], %109 {strides = array<i32>} : memref<72x256xf32, #tpu.memory_space<vmem>>, vector<8x256xf32>,
    %c15_i32_79 = arith.constant 15 : i32
    %111 = tpu.dynamic_rotate %102 by %c15_i32_79 dim 1 : vector<8x256xf32>, i32 -> vector<8x256xf32>
    %112 = vector.broadcast %2 : vector<1x256xf32> to vector<8x256xf32>
    %113 = arith.mulf %111, %112 : vector<8x256xf32>
    %c16_80 = arith.constant 16 : index
    %c0_81 = arith.constant 0 : index
    %114 = vector.load %arg10[%c16_80, %c0_81] : memref<72x256xf32, #tpu.memory_space<vmem>>, vector<8x256xf32>
    tpu.vector_store %arg10[%c16_80, %c0_81], %113 {strides = array<i32>} : memref<72x256xf32, #tpu.memory_space<vmem>>, vector<8x256xf32>,
    %c1_i32_82 = arith.constant 1 : i32
    %115 = tpu.dynamic_rotate %102 by %c1_i32_82 dim 1 : vector<8x256xf32>, i32 -> vector<8x256xf32>
    %116 = vector.broadcast %3 : vector<1x256xf32> to vector<8x256xf32>
    %117 = arith.mulf %115, %116 : vector<8x256xf32>
    %c24_83 = arith.constant 24 : index
    %c0_84 = arith.constant 0 : index
    %118 = vector.load %arg10[%c24_83, %c0_84] : memref<72x256xf32, #tpu.memory_space<vmem>>, vector<8x256xf32>
    tpu.vector_store %arg10[%c24_83, %c0_84], %117 {strides = array<i32>} : memref<72x256xf32, #tpu.memory_space<vmem>>, vector<8x256xf32>,
    %c32_85 = arith.constant 32 : index
    %c0_86 = arith.constant 0 : index
    %119 = vector.load %arg10[%c32_85, %c0_86] : memref<72x256xf32, #tpu.memory_space<vmem>>, vector<8x256xf32>
    tpu.vector_store %arg10[%c32_85, %c0_86], %102 {strides = array<i32>} : memref<72x256xf32, #tpu.memory_space<vmem>>, vector<8x256xf32>,
    %c255_i32_87 = arith.constant 255 : i32
    %120 = tpu.dynamic_rotate %102 by %c255_i32_87 dim 1 : vector<8x256xf32>, i32 -> vector<8x256xf32>
    %121 = vector.broadcast %4 : vector<1x256xf32> to vector<8x256xf32>
    %122 = arith.mulf %120, %121 : vector<8x256xf32>
    %c40_88 = arith.constant 40 : index
    %c0_89 = arith.constant 0 : index
    %123 = vector.load %arg10[%c40_88, %c0_89] : memref<72x256xf32, #tpu.memory_space<vmem>>, vector<8x256xf32>
    tpu.vector_store %arg10[%c40_88, %c0_89], %122 {strides = array<i32>} : memref<72x256xf32, #tpu.memory_space<vmem>>, vector<8x256xf32>,
    %c241_i32_90 = arith.constant 241 : i32
    %124 = tpu.dynamic_rotate %102 by %c241_i32_90 dim 1 : vector<8x256xf32>, i32 -> vector<8x256xf32>
    %125 = vector.broadcast %5 : vector<1x256xf32> to vector<8x256xf32>
    %126 = arith.mulf %124, %125 : vector<8x256xf32>
    %c48_91 = arith.constant 48 : index
    %c0_92 = arith.constant 0 : index
    %127 = vector.load %arg10[%c48_91, %c0_92] : memref<72x256xf32, #tpu.memory_space<vmem>>, vector<8x256xf32>
    tpu.vector_store %arg10[%c48_91, %c0_92], %126 {strides = array<i32>} : memref<72x256xf32, #tpu.memory_space<vmem>>, vector<8x256xf32>,
    %c240_i32_93 = arith.constant 240 : i32
    %128 = tpu.dynamic_rotate %102 by %c240_i32_93 dim 1 : vector<8x256xf32>, i32 -> vector<8x256xf32>
    %129 = vector.broadcast %6 : vector<1x256xf32> to vector<8x256xf32>
    %130 = arith.mulf %128, %129 : vector<8x256xf32>
    %c56_94 = arith.constant 56 : index
    %c0_95 = arith.constant 0 : index
    %131 = vector.load %arg10[%c56_94, %c0_95] : memref<72x256xf32, #tpu.memory_space<vmem>>, vector<8x256xf32>
    tpu.vector_store %arg10[%c56_94, %c0_95], %130 {strides = array<i32>} : memref<72x256xf32, #tpu.memory_space<vmem>>, vector<8x256xf32>,
    %c239_i32_96 = arith.constant 239 : i32
    %132 = tpu.dynamic_rotate %102 by %c239_i32_96 dim 1 : vector<8x256xf32>, i32 -> vector<8x256xf32>
    %133 = vector.broadcast %7 : vector<1x256xf32> to vector<8x256xf32>
    %134 = arith.mulf %132, %133 : vector<8x256xf32>
    %c64_97 = arith.constant 64 : index
    %c0_98 = arith.constant 0 : index
    %135 = vector.load %arg10[%c64_97, %c0_98] : memref<72x256xf32, #tpu.memory_space<vmem>>, vector<8x256xf32>
    tpu.vector_store %arg10[%c64_97, %c0_98], %134 {strides = array<i32>} : memref<72x256xf32, #tpu.memory_space<vmem>>, vector<8x256xf32>,
    %c0_99 = arith.constant 0 : index
    %c0_100 = arith.constant 0 : index
    %136 = vector.load %arg10[%c0_99, %c0_100] : memref<72x256xf32, #tpu.memory_space<vmem>>, vector<72x256xf32>
    %cst_101 = arith.constant dense<0.000000e+00> : vector<8x256xf32>
    %137 = tpu.matmul %8, %136, %cst_101 {dimension_numbers = #tpu.dot_dimension_numbers<[1], [0], [0], [1], [0, 0, 1, 1], [], []>} : vector<8x72xf32>, vector<72x256xf32>, vector<8x256xf32> -> vector<8x256xf32>
    %138 = vector.broadcast %10 : vector<8x1xf32> to vector<8x256xf32>
    %139 = arith.mulf %137, %138 : vector<8x256xf32>
    %140 = vector.broadcast %11 : vector<8x1xf32> to vector<8x256xf32>
    %141 = arith.addf %139, %140 : vector<8x256xf32>
    %cst_102 = arith.constant 0.000000e+00 : f32
    %142 = vector.broadcast %cst_102 : f32 to vector<8x256xf32>
    %143 = arith.maximumf %141, %142 : vector<8x256xf32>
    %c17_i32_103 = arith.constant 17 : i32
    %144 = tpu.dynamic_rotate %143 by %c17_i32_103 dim 1 : vector<8x256xf32>, i32 -> vector<8x256xf32>
    %145 = vector.broadcast %0 : vector<1x256xf32> to vector<8x256xf32>
    %146 = arith.mulf %144, %145 : vector<8x256xf32>
    %c0_104 = arith.constant 0 : index
    %c0_105 = arith.constant 0 : index
    %147 = vector.load %arg10[%c0_104, %c0_105] : memref<72x256xf32, #tpu.memory_space<vmem>>, vector<8x256xf32>
    tpu.vector_store %arg10[%c0_104, %c0_105], %146 {strides = array<i32>} : memref<72x256xf32, #tpu.memory_space<vmem>>, vector<8x256xf32>,
    %c16_i32_106 = arith.constant 16 : i32
    %148 = tpu.dynamic_rotate %143 by %c16_i32_106 dim 1 : vector<8x256xf32>, i32 -> vector<8x256xf32>
    %149 = vector.broadcast %1 : vector<1x256xf32> to vector<8x256xf32>
    %150 = arith.mulf %148, %149 : vector<8x256xf32>
    %c8_107 = arith.constant 8 : index
    %c0_108 = arith.constant 0 : index
    %151 = vector.load %arg10[%c8_107, %c0_108] : memref<72x256xf32, #tpu.memory_space<vmem>>, vector<8x256xf32>
    tpu.vector_store %arg10[%c8_107, %c0_108], %150 {strides = array<i32>} : memref<72x256xf32, #tpu.memory_space<vmem>>, vector<8x256xf32>,
    %c15_i32_109 = arith.constant 15 : i32
    %152 = tpu.dynamic_rotate %143 by %c15_i32_109 dim 1 : vector<8x256xf32>, i32 -> vector<8x256xf32>
    %153 = vector.broadcast %2 : vector<1x256xf32> to vector<8x256xf32>
    %154 = arith.mulf %152, %153 : vector<8x256xf32>
    %c16_110 = arith.constant 16 : index
    %c0_111 = arith.constant 0 : index
    %155 = vector.load %arg10[%c16_110, %c0_111] : memref<72x256xf32, #tpu.memory_space<vmem>>, vector<8x256xf32>
    tpu.vector_store %arg10[%c16_110, %c0_111], %154 {strides = array<i32>} : memref<72x256xf32, #tpu.memory_space<vmem>>, vector<8x256xf32>,
    %c1_i32_112 = arith.constant 1 : i32
    %156 = tpu.dynamic_rotate %143 by %c1_i32_112 dim 1 : vector<8x256xf32>, i32 -> vector<8x256xf32>
    %157 = vector.broadcast %3 : vector<1x256xf32> to vector<8x256xf32>
    %158 = arith.mulf %156, %157 : vector<8x256xf32>
    %c24_113 = arith.constant 24 : index
    %c0_114 = arith.constant 0 : index
    %159 = vector.load %arg10[%c24_113, %c0_114] : memref<72x256xf32, #tpu.memory_space<vmem>>, vector<8x256xf32>
    tpu.vector_store %arg10[%c24_113, %c0_114], %158 {strides = array<i32>} : memref<72x256xf32, #tpu.memory_space<vmem>>, vector<8x256xf32>,
    %c32_115 = arith.constant 32 : index
    %c0_116 = arith.constant 0 : index
    %160 = vector.load %arg10[%c32_115, %c0_116] : memref<72x256xf32, #tpu.memory_space<vmem>>, vector<8x256xf32>
    tpu.vector_store %arg10[%c32_115, %c0_116], %143 {strides = array<i32>} : memref<72x256xf32, #tpu.memory_space<vmem>>, vector<8x256xf32>,
    %c255_i32_117 = arith.constant 255 : i32
    %161 = tpu.dynamic_rotate %143 by %c255_i32_117 dim 1 : vector<8x256xf32>, i32 -> vector<8x256xf32>
    %162 = vector.broadcast %4 : vector<1x256xf32> to vector<8x256xf32>
    %163 = arith.mulf %161, %162 : vector<8x256xf32>
    %c40_118 = arith.constant 40 : index
    %c0_119 = arith.constant 0 : index
    %164 = vector.load %arg10[%c40_118, %c0_119] : memref<72x256xf32, #tpu.memory_space<vmem>>, vector<8x256xf32>
    tpu.vector_store %arg10[%c40_118, %c0_119], %163 {strides = array<i32>} : memref<72x256xf32, #tpu.memory_space<vmem>>, vector<8x256xf32>,
    %c241_i32_120 = arith.constant 241 : i32
    %165 = tpu.dynamic_rotate %143 by %c241_i32_120 dim 1 : vector<8x256xf32>, i32 -> vector<8x256xf32>
    %166 = vector.broadcast %5 : vector<1x256xf32> to vector<8x256xf32>
    %167 = arith.mulf %165, %166 : vector<8x256xf32>
    %c48_121 = arith.constant 48 : index
    %c0_122 = arith.constant 0 : index
    %168 = vector.load %arg10[%c48_121, %c0_122] : memref<72x256xf32, #tpu.memory_space<vmem>>, vector<8x256xf32>
    tpu.vector_store %arg10[%c48_121, %c0_122], %167 {strides = array<i32>} : memref<72x256xf32, #tpu.memory_space<vmem>>, vector<8x256xf32>,
    %c240_i32_123 = arith.constant 240 : i32
    %169 = tpu.dynamic_rotate %143 by %c240_i32_123 dim 1 : vector<8x256xf32>, i32 -> vector<8x256xf32>
    %170 = vector.broadcast %6 : vector<1x256xf32> to vector<8x256xf32>
    %171 = arith.mulf %169, %170 : vector<8x256xf32>
    %c56_124 = arith.constant 56 : index
    %c0_125 = arith.constant 0 : index
    %172 = vector.load %arg10[%c56_124, %c0_125] : memref<72x256xf32, #tpu.memory_space<vmem>>, vector<8x256xf32>
    tpu.vector_store %arg10[%c56_124, %c0_125], %171 {strides = array<i32>} : memref<72x256xf32, #tpu.memory_space<vmem>>, vector<8x256xf32>,
    %c239_i32_126 = arith.constant 239 : i32
    %173 = tpu.dynamic_rotate %143 by %c239_i32_126 dim 1 : vector<8x256xf32>, i32 -> vector<8x256xf32>
    %174 = vector.broadcast %7 : vector<1x256xf32> to vector<8x256xf32>
    %175 = arith.mulf %173, %174 : vector<8x256xf32>
    %c64_127 = arith.constant 64 : index
    %c0_128 = arith.constant 0 : index
    %176 = vector.load %arg10[%c64_127, %c0_128] : memref<72x256xf32, #tpu.memory_space<vmem>>, vector<8x256xf32>
    tpu.vector_store %arg10[%c64_127, %c0_128], %175 {strides = array<i32>} : memref<72x256xf32, #tpu.memory_space<vmem>>, vector<8x256xf32>,
    %c0_129 = arith.constant 0 : index
    %c0_130 = arith.constant 0 : index
    %177 = vector.load %arg10[%c0_129, %c0_130] : memref<72x256xf32, #tpu.memory_space<vmem>>, vector<72x256xf32>
    %cst_131 = arith.constant dense<0.000000e+00> : vector<8x256xf32>
    %178 = tpu.matmul %9, %177, %cst_131 {dimension_numbers = #tpu.dot_dimension_numbers<[1], [0], [0], [1], [0, 0, 1, 1], [], []>} : vector<8x72xf32>, vector<72x256xf32>, vector<8x256xf32> -> vector<8x256xf32>
    %179 = vector.broadcast %12 : vector<8x1xf32> to vector<8x256xf32>
    %180 = arith.mulf %178, %179 : vector<8x256xf32>
    %181 = vector.broadcast %13 : vector<8x1xf32> to vector<8x256xf32>
    %182 = arith.addf %180, %181 : vector<8x256xf32>
    %cst_132 = arith.constant 0.000000e+00 : f32
    %183 = vector.broadcast %cst_132 : f32 to vector<8x256xf32>
    %184 = arith.maximumf %182, %183 : vector<8x256xf32>
    %c1_133 = arith.constant 1 : index
    %c0_134 = arith.constant 0 : index
    %c0_135 = arith.constant 0 : index
    %185 = vector.load %arg9[%c1_133, %c0_134, %c0_135] : memref<2x8x256xf32, #tpu.memory_space<vmem>>, vector<1x8x256xf32>
    %186 = vector.shape_cast %185 : vector<1x8x256xf32> to vector<8x256xf32>
    %187 = vector.shape_cast %184 : vector<8x256xf32> to vector<1x8x256xf32>
    tpu.vector_store %arg9[%c1_133, %c0_134, %c0_135], %187 {strides = array<i32>} : memref<2x8x256xf32, #tpu.memory_space<vmem>>, vector<1x8x256xf32>,
    return
  }
  func.func @transform_0(%arg0: i32) -> (i32, i32, i32) {
    %c0_i32 = arith.constant 0 : i32
    %c0_i32_0 = arith.constant 0 : i32
    %c0_i32_1 = arith.constant 0 : i32
    return %arg0, %c0_i32, %c0_i32_0 : i32, i32, i32
  }
  func.func @transform_1(%arg0: i32) -> (i32, i32) {
    %c0_i32 = arith.constant 0 : i32
    %c0_i32_0 = arith.constant 0 : i32
    %c0_i32_1 = arith.constant 0 : i32
    return %c0_i32, %c0_i32_0 : i32, i32
  }
  func.func @transform_2(%arg0: i32) -> (i32, i32) {
    %c0_i32 = arith.constant 0 : i32
    %c0_i32_0 = arith.constant 0 : i32
    %c0_i32_1 = arith.constant 0 : i32
    return %c0_i32, %c0_i32_0 : i32, i32
  }
  func.func @transform_3(%arg0: i32) -> (i32, i32) {
    %c0_i32 = arith.constant 0 : i32
    %c0_i32_0 = arith.constant 0 : i32
    %c0_i32_1 = arith.constant 0 : i32
    return %c0_i32, %c0_i32_0 : i32, i32
  }
  func.func @transform_4(%arg0: i32) -> (i32, i32) {
    %c0_i32 = arith.constant 0 : i32
    %c0_i32_0 = arith.constant 0 : i32
    %c0_i32_1 = arith.constant 0 : i32
    return %c0_i32, %c0_i32_0 : i32, i32
  }
  func.func @transform_5(%arg0: i32) -> (i32, i32) {
    %c0_i32 = arith.constant 0 : i32
    %c0_i32_0 = arith.constant 0 : i32
    %c0_i32_1 = arith.constant 0 : i32
    return %c0_i32, %c0_i32_0 : i32, i32
  }
  func.func @transform_6(%arg0: i32) -> (i32, i32) {
    %c0_i32 = arith.constant 0 : i32
    %c0_i32_0 = arith.constant 0 : i32
    %c0_i32_1 = arith.constant 0 : i32
    return %c0_i32, %c0_i32_0 : i32, i32
  }
  func.func @transform_7(%arg0: i32) -> (i32, i32) {
    %c0_i32 = arith.constant 0 : i32
    %c0_i32_0 = arith.constant 0 : i32
    %c0_i32_1 = arith.constant 0 : i32
    return %c0_i32, %c0_i32_0 : i32, i32
  }
  func.func @transform_8(%arg0: i32) -> (i32, i32, i32) {
    %c0_i32 = arith.constant 0 : i32
    %c0_i32_0 = arith.constant 0 : i32
    %c0_i32_1 = arith.constant 0 : i32
    return %arg0, %c0_i32, %c0_i32_0 : i32, i32, i32
  }
}

</mosaic_0001>

<llo_original>
// kernel: tpu_custom_call.1
$region0: #{tpu_custom_call.1}
  #allocation0 [shape = 'u32[]', space=smem, size = 0x4, offset = 0x4, fixed_abs, tag = 'smem constant byte address 0x4 - core index']
  #allocation1 [shape = 'u32[144,128]{1,0:T(1,128)}', space=vmem, size = 0x12000, scoped, tag = 'internal scratch']
  #allocation2 [shape = 'f32[72,256]{1,0:T(8,128)}', space=vmem, size = 0x12000, scoped, tag = 'scratch operand']
  %s0 = inlined_call_operand.hbm [shape: f32[4,8,256], index: 0, kind: input, shape index: {}]
  %s1 = inlined_call_operand.vmem [shape: f32[9,256], index: 1, kind: input, shape index: {}]
  %s2 = inlined_call_operand.vmem [shape: f32[8,72], index: 2, kind: input, shape index: {}]
  %s3 = inlined_call_operand.hbm [shape: f32[8,72], index: 3, kind: input, shape index: {}]
  %s4 = inlined_call_operand.vmem [shape: f32[8,1], index: 4, kind: input, shape index: {}]
  %s5 = inlined_call_operand.vmem [shape: f32[8,1], index: 5, kind: input, shape index: {}]
  %s6 = inlined_call_operand.vmem [shape: f32[8,1], index: 6, kind: input, shape index: {}]
  %s7 = inlined_call_operand.vmem [shape: f32[8,1], index: 7, kind: input, shape index: {}]
  %s8 = inlined_call_operand.hbm [shape: f32[4,8,256], index: 8, kind: output, shape index: {}]
  %s9 = sld [smem:[#allocation0]]
  $region73: #{tpu_custom_call.1} parent=0
    _
  %s11 = ssub.s32 1, %s9
  %s12 = scalar_select 0, %s11, %s9
  $region1: #{tpu_custom_call.1} parent=0
    #allocation3 [shape = 'u8[32768]{0}', space=vmem, size = 0x8000, scoped, tag = 'input window, operand 0']
    #allocation4 [shape = 's32[2]{0}', space=sflag, size = 0x8, scoped, tag = 'scoped memory for tpu_custom_call.1']
    #allocation5 [shape = 's32[2]{0}', space=sflag, size = 0x8, scoped, tag = 'scoped memory for tpu_custom_call.1']
    #allocation6 [shape = 'u8[4096]{0}', space=vmem, size = 0x1000, scoped, tag = 'input window, operand 3, single buffered']
    #allocation7 [shape = 's32[1]{0}', space=sflag, size = 0x4, scoped, tag = 'scoped memory for tpu_custom_call.1']
    #allocation8 [shape = 'u8[32768]{0}', space=vmem, size = 0x8000, scoped, tag = 'output window, operand 0']
    %13 = vsyncpa [#allocation4], 0
    %s14 = scalar_lea.sflag [#allocation4], 1
    %15 = vsyncpa %s14, 0
    %16 = vsyncpa [#allocation7], 0
    %17 = vsyncpa [#allocation5], 0
    %s18 = scalar_lea.sflag [#allocation5], 1
    %19 = vsyncpa %s18, 0
    loop: start=0, step=1, limit=4
    $region2: #{tpu_custom_call.1} parent=1 // loop_pre_header
      _
    $region3: #{tpu_custom_call.1} parent=1 // loop_header
      %s21 = sphi 0, %s25
      %p22 = scmp.ge.s32.totalorder %s21, 4
      %s31 = sphi 0, %s33
      %s34 = sphi 0, %s31
      %s35 = sphi 0, %s34
      %s51 = sphi 0, %s35
      %s55 = sphi 0, %s55
      %s57 = sphi 0, %s55
      %s58 = sphi 0, %s57
      %s72 = sphi 0, %s58
      %s76 = sphi 0, %s76
      %s78 = sphi 0, %s76
      %s79 = sphi 0, %s78
      %s93 = sphi 0, %s79
      %s97 = sphi 0, %s97
      %s99 = sphi 0, %s97
      %s100 = sphi 0, %s99
      %s114 = sphi 0, %s100
      %s118 = sphi 0, %s118
      %s120 = sphi 0, %s118
      %s121 = sphi 0, %s120
      %s135 = sphi 0, %s121
      %s139 = sphi 0, %s139
      %s141 = sphi 0, %s139
      %s142 = sphi 0, %s141
      %s156 = sphi 0, %s142
      %s160 = sphi 0, %s160
      %s162 = sphi 0, %s160
      %s163 = sphi 0, %s162
      %s177 = sphi 0, %s163
      %s181 = sphi 0, %s181
      %s183 = sphi 0, %s181
      %s184 = sphi 0, %s183
      %s198 = sphi 0, %s184
      %s204 = sphi 0, %s206
      %s207 = sphi 0, %s204
      %s208 = sphi 0, %s207
      %s224 = sphi 0, %s208
    $region4: #{tpu_custom_call.1} parent=1 // loop_header_branch
      %24 = sbr.rel (%p22) target = $region8
    $region5: #{tpu_custom_call.1} parent=1 // loop_body
      %s26 = ssub.s32 %s21, 1
      %s27 = ssub.s32 %s21, 2
      %s28 = sadd.s32 %s21, 1
      %s29 = ssub.s32 %s21, %s28
      %p30 = scmp.eq.s32.totalorder %s29, 0
      %s32 = sadd.s32 %s31, 1
      %s33 = scalar_select %p30, %s31, %s32
      %p36 = pneg %p30
      %p37 = scmp.eq.s32.totalorder %s21, 1
      %p38 = por %p36, %p37
      %p39 = scmp.ne.s32.totalorder %s31, %s34
      %p40 = scmp.eq.s32.totalorder %s21, 0
      %p41 = por %p39, %p40
      %p42 = scmp.ne.s32.totalorder %s31, %s34
      %p43 = scmp.eq.s32.totalorder %s26, 1
      %p44 = por %p42, %p43
      %p45 = scmp.ne.s32.totalorder %s34, %s35
      %p46 = scmp.eq.s32.totalorder %s26, 0
      %p47 = por %p45, %p46
      %p48 = scmp.ne.s32.totalorder %s34, %s35
      %p49 = scmp.eq.s32.totalorder %s27, 1
      %p50 = por %p48, %p49
      %p52 = scmp.ne.s32.totalorder %s35, %s51
      %p53 = scmp.eq.s32.totalorder %s27, 0
      %p54 = por %p52, %p53
      %s56 = sadd.s32 %s55, 1
      %p59 = scmp.eq.s32.totalorder %s21, 1
      %p60 = scmp.ne.s32.totalorder %s55, %s57
      %p61 = scmp.eq.s32.totalorder %s21, 0
      %p62 = por %p60, %p61
      %p63 = scmp.ne.s32.totalorder %s55, %s57
      %p64 = scmp.eq.s32.totalorder %s26, 1
      %p65 = por %p63, %p64
      %p66 = scmp.ne.s32.totalorder %s57, %s58
      %p67 = scmp.eq.s32.totalorder %s26, 0
      %p68 = por %p66, %p67
      %p69 = scmp.ne.s32.totalorder %s57, %s58
      %p70 = scmp.eq.s32.totalorder %s27, 1
      %p71 = por %p69, %p70
      %p73 = scmp.ne.s32.totalorder %s58, %s72
      %p74 = scmp.eq.s32.totalorder %s27, 0
      %p75 = por %p73, %p74
      %s77 = sadd.s32 %s76, 1
      %p80 = scmp.eq.s32.totalorder %s21, 1
      %p81 = scmp.ne.s32.totalorder %s76, %s78
      %p82 = scmp.eq.s32.totalorder %s21, 0
      %p83 = por %p81, %p82
      %p84 = scmp.ne.s32.totalorder %s76, %s78
      %p85 = scmp.eq.s32.totalorder %s26, 1
      %p86 = por %p84, %p85
      %p87 = scmp.ne.s32.totalorder %s78, %s79
      %p88 = scmp.eq.s32.totalorder %s26, 0
      %p89 = por %p87, %p88
      %p90 = scmp.ne.s32.totalorder %s78, %s79
      %p91 = scmp.eq.s32.totalorder %s27, 1
      %p92 = por %p90, %p91
      %p94 = scmp.ne.s32.totalorder %s79, %s93
      %p95 = scmp.eq.s32.totalorder %s27, 0
      %p96 = por %p94, %p95
      %s98 = sadd.s32 %s97, 1
      %p101 = scmp.eq.s32.totalorder %s21, 1
      %p102 = scmp.ne.s32.totalorder %s97, %s99
      %p103 = scmp.eq.s32.totalorder %s21, 0
      %p104 = por %p102, %p103
      %p105 = scmp.ne.s32.totalorder %s97, %s99
      %p106 = scmp.eq.s32.totalorder %s26, 1
      %p107 = por %p105, %p106
      %p108 = scmp.ne.s32.totalorder %s99, %s100
      %p109 = scmp.eq.s32.totalorder %s26, 0
      %p110 = por %p108, %p109
      %p111 = scmp.ne.s32.totalorder %s99, %s100
      %p112 = scmp.eq.s32.totalorder %s27, 1
      %p113 = por %p111, %p112
      %p115 = scmp.ne.s32.totalorder %s100, %s114
      %p116 = scmp.eq.s32.totalorder %s27, 0
      %p117 = por %p115, %p116
      %s119 = sadd.s32 %s118, 1
      %p122 = scmp.eq.s32.totalorder %s21, 1
      %p123 = scmp.ne.s32.totalorder %s118, %s120
      %p124 = scmp.eq.s32.totalorder %s21, 0
      %p125 = por %p123, %p124
      %p126 = scmp.ne.s32.totalorder %s118, %s120
      %p127 = scmp.eq.s32.totalorder %s26, 1
      %p128 = por %p126, %p127
      %p129 = scmp.ne.s32.totalorder %s120, %s121
      %p130 = scmp.eq.s32.totalorder %s26, 0
      %p131 = por %p129, %p130
      %p132 = scmp.ne.s32.totalorder %s120, %s121
      %p133 = scmp.eq.s32.totalorder %s27, 1
      %p134 = por %p132, %p133
      %p136 = scmp.ne.s32.totalorder %s121, %s135
      %p137 = scmp.eq.s32.totalorder %s27, 0
      %p138 = por %p136, %p137
      %s140 = sadd.s32 %s139, 1
      %p143 = scmp.eq.s32.totalorder %s21, 1
      %p144 = scmp.ne.s32.totalorder %s139, %s141
      %p145 = scmp.eq.s32.totalorder %s21, 0
      %p146 = por %p144, %p145
      %p147 = scmp.ne.s32.totalorder %s139, %s141
      %p148 = scmp.eq.s32.totalorder %s26, 1
      %p149 = por %p147, %p148
      %p150 = scmp.ne.s32.totalorder %s141, %s142
      %p151 = scmp.eq.s32.totalorder %s26, 0
      %p152 = por %p150, %p151
      %p153 = scmp.ne.s32.totalorder %s141, %s142
      %p154 = scmp.eq.s32.totalorder %s27, 1
      %p155 = por %p153, %p154
      %p157 = scmp.ne.s32.totalorder %s142, %s156
      %p158 = scmp.eq.s32.totalorder %s27, 0
      %p159 = por %p157, %p158
      %s161 = sadd.s32 %s160, 1
      %p164 = scmp.eq.s32.totalorder %s21, 1
      %p165 = scmp.ne.s32.totalorder %s160, %s162
      %p166 = scmp.eq.s32.totalorder %s21, 0
      %p167 = por %p165, %p166
      %p168 = scmp.ne.s32.totalorder %s160, %s162
      %p169 = scmp.eq.s32.totalorder %s26, 1
      %p170 = por %p168, %p169
      %p171 = scmp.ne.s32.totalorder %s162, %s163
      %p172 = scmp.eq.s32.totalorder %s26, 0
      %p173 = por %p171, %p172
      %p174 = scmp.ne.s32.totalorder %s162, %s163
      %p175 = scmp.eq.s32.totalorder %s27, 1
      %p176 = por %p174, %p175
      %p178 = scmp.ne.s32.totalorder %s163, %s177
      %p179 = scmp.eq.s32.totalorder %s27, 0
      %p180 = por %p178, %p179
      %s182 = sadd.s32 %s181, 1
      %p185 = scmp.eq.s32.totalorder %s21, 1
      %p186 = scmp.ne.s32.totalorder %s181, %s183
      %p187 = scmp.eq.s32.totalorder %s21, 0
      %p188 = por %p186, %p187
      %p189 = scmp.ne.s32.totalorder %s181, %s183
      %p190 = scmp.eq.s32.totalorder %s26, 1
      %p191 = por %p189, %p190
      %p192 = scmp.ne.s32.totalorder %s183, %s184
      %p193 = scmp.eq.s32.totalorder %s26, 0
      %p194 = por %p192, %p193
      %p195 = scmp.ne.s32.totalorder %s183, %s184
      %p196 = scmp.eq.s32.totalorder %s27, 1
      %p197 = por %p195, %p196
      %p199 = scmp.ne.s32.totalorder %s184, %s198
      %p200 = scmp.eq.s32.totalorder %s27, 0
      %p201 = por %p199, %p200
      %s202 = ssub.s32 %s21, %s28
      %p203 = scmp.eq.s32.totalorder %s202, 0
      %s205 = sadd.s32 %s204, 1
      %s206 = scalar_select %p203, %s204, %s205
      %p209 = pneg %p203
      %p210 = scmp.eq.s32.totalorder %s21, 1
      %p211 = por %p209, %p210
      %p212 = scmp.ne.s32.totalorder %s204, %s207
      %p213 = scmp.eq.s32.totalorder %s21, 0
      %p214 = por %p212, %p213
      %p215 = scmp.ne.s32.totalorder %s204, %s207
      %p216 = scmp.eq.s32.totalorder %s26, 1
      %p217 = por %p215, %p216
      %p218 = scmp.ne.s32.totalorder %s207, %s208
      %p219 = scmp.eq.s32.totalorder %s26, 0
      %p220 = por %p218, %p219
      %p221 = scmp.ne.s32.totalorder %s207, %s208
      %p222 = scmp.eq.s32.totalorder %s27, 1
      %p223 = por %p221, %p222
      %p225 = scmp.ne.s32.totalorder %s208, %s224
      %p226 = scmp.eq.s32.totalorder %s27, 0
      %p227 = por %p225, %p226
      %p228 = scmp.le.s32.totalorder 1, %s21
      %p229 = scmp.lt.s32.totalorder %s21, 3
      %p230 = pnand %p228, %p229
      %p231 = pneg %p230
      // Predicated region
      $region9: #{tpu_custom_call.1} parent=5 // pred_check
        _
      $region10: #{tpu_custom_call.1} parent=5 // pred_check_branch
        %233 = sbr.rel (%p230) target = $region12
      $region11: #{tpu_custom_call.1} parent=5 // pred_region
        %s234 = ssub.s32 %s21, 1
        // Predicated region
        $region13: #{tpu_custom_call.1} parent=11 // pred_check
          %p235 = pneg %p68
        $region14: #{tpu_custom_call.1} parent=11 // pred_check_branch
          %237 = sbr.rel (%p235) target = $region16
        $region15: #{tpu_custom_call.1} parent=11 // pred_region
          _
        $region16: #{tpu_custom_call.1} parent=11 // pred_fallthru
          _
        // Predicated region
        $region17: #{tpu_custom_call.1} parent=11 // pred_check
          %p238 = pneg %p89
        $region18: #{tpu_custom_call.1} parent=11 // pred_check_branch
          %240 = sbr.rel (%p238) target = $region20
        $region19: #{tpu_custom_call.1} parent=11 // pred_region
          _
        $region20: #{tpu_custom_call.1} parent=11 // pred_fallthru
          _
        // Predicated region
        $region21: #{tpu_custom_call.1} parent=11 // pred_check
          %p241 = pneg %p110
        $region22: #{tpu_custom_call.1} parent=11 // pred_check_branch
          %243 = sbr.rel (%p241) target = $region24
        $region23: #{tpu_custom_call.1} parent=11 // pred_region
          %s245 = ssub.s32 128, 128
          %246 = vsyncadd [#allocation7], %s245
          %s248 = sshll.u32 [#allocation6], 4
          %s249 = int_to_ptr.vmem [resolvable:$true] %s248
          %251 = dma.hbm_to_vmem [thread:$0]  %s3, 128, %s249, [#allocation7]
        $region24: #{tpu_custom_call.1} parent=11 // pred_fallthru
          _
        // Predicated region
        $region25: #{tpu_custom_call.1} parent=11 // pred_check
          %p252 = pneg %p131
        $region26: #{tpu_custom_call.1} parent=11 // pred_check_branch
          %254 = sbr.rel (%p252) target = $region28
        $region27: #{tpu_custom_call.1} parent=11 // pred_region
          _
        $region28: #{tpu_custom_call.1} parent=11 // pred_fallthru
          _
        // Predicated region
        $region29: #{tpu_custom_call.1} parent=11 // pred_check
          %p255 = pneg %p152
        $region30: #{tpu_custom_call.1} parent=11 // pred_check_branch
          %257 = sbr.rel (%p255) target = $region32
        $region31: #{tpu_custom_call.1} parent=11 // pred_region
          _
        $region32: #{tpu_custom_call.1} parent=11 // pred_fallthru
          _
        // Predicated region
        $region33: #{tpu_custom_call.1} parent=11 // pred_check
          %p258 = pneg %p173
        $region34: #{tpu_custom_call.1} parent=11 // pred_check_branch
          %260 = sbr.rel (%p258) target = $region36
        $region35: #{tpu_custom_call.1} parent=11 // pred_region
          _
        $region36: #{tpu_custom_call.1} parent=11 // pred_fallthru
          _
        // Predicated region
        $region37: #{tpu_custom_call.1} parent=11 // pred_check
          %p261 = pneg %p194
        $region38: #{tpu_custom_call.1} parent=11 // pred_check_branch
          %263 = sbr.rel (%p261) target = $region40
        $region39: #{tpu_custom_call.1} parent=11 // pred_region
          _
        $region40: #{tpu_custom_call.1} parent=11 // pred_fallthru
          _
      $region12: #{tpu_custom_call.1} parent=5 // pred_fallthru
        _
      %p264 = scmp.lt.s32.totalorder %s21, 2
      // Predicated region
      $region41: #{tpu_custom_call.1} parent=5 // pred_check
        %p265 = pneg %p264
      $region42: #{tpu_custom_call.1} parent=5 // pred_check_branch
        %267 = sbr.rel (%p265) target = $region44
      $region43: #{tpu_custom_call.1} parent=5 // pred_region
        // Predicated region
        $region45: #{tpu_custom_call.1} parent=43 // pred_check
          %p268 = pneg %p41
        $region46: #{tpu_custom_call.1} parent=43 // pred_check_branch
          %270 = sbr.rel (%p268) target = $region48
        $region47: #{tpu_custom_call.1} parent=43 // pred_region
          %s271 = sand.u32 %s31, 1
          %s272 = scalar_lea.sflag [#allocation4], %s271
          %s273 = sand.u32 %s31, 1
          %s274 = smul.addr %s273, 32
          %s275 = scalar_lea.vmem [#allocation3], %s274
          %s276 = smul.u32 2, %s21
          %s278 = ssub.s32 512, 512
          %279 = vsyncadd %s272, %s278
          %s280 = smul.addr %s276, 2
          %s281 = smul.addr %s280, 128
          %s282 = scalar_lea.hbm %s0, %s281
          %s283 = sshll.u32 %s275, 4
          %s284 = int_to_ptr.vmem [resolvable:$true] %s283
          %289 = dma.hbm_to_vmem [thread:$0]  %s282, 512, %s284, %s272, 256, 256, 16
        $region48: #{tpu_custom_call.1} parent=43 // pred_fallthru
          _
      $region44: #{tpu_custom_call.1} parent=5 // pred_fallthru
        _
      %p290 = scmp.le.s32.totalorder 1, %s21
      %p291 = scmp.lt.s32.totalorder %s21, 3
      %p292 = pnand %p290, %p291
      %p293 = pneg %p292
      // Predicated region
      $region49: #{tpu_custom_call.1} parent=5 // pred_check
        _
      $region50: #{tpu_custom_call.1} parent=5 // pred_check_branch
        %295 = sbr.rel (%p292) target = $region52
      $region51: #{tpu_custom_call.1} parent=5 // pred_region
        %s296 = ssub.s32 %s21, 1
        %s297 = sand.u32 %s34, 1
        %s298 = scalar_lea.sflag [#allocation4], %s297
        %s299 = sand.u32 %s34, 1
        %s300 = smul.addr %s299, 32
        %s301 = scalar_lea.vmem [#allocation3], %s300
        // Predicated region
        $region53: #{tpu_custom_call.1} parent=51 // pred_check
          %p302 = pneg %p47
        $region54: #{tpu_custom_call.1} parent=51 // pred_check_branch
          %304 = sbr.rel (%p302) target = $region56
        $region55: #{tpu_custom_call.1} parent=51 // pred_region
          %305 = dma.done %s298, 512
        $region56: #{tpu_custom_call.1} parent=51 // pred_fallthru
          _
        // Predicated region
        $region57: #{tpu_custom_call.1} parent=51 // pred_check
          %p306 = pneg %p110
        $region58: #{tpu_custom_call.1} parent=51 // pred_check_branch
          %308 = sbr.rel (%p306) target = $region60
        $region59: #{tpu_custom_call.1} parent=51 // pred_region
          %309 = dma.done [#allocation7], 128
        $region60: #{tpu_custom_call.1} parent=51 // pred_fallthru
          _
        %s310 = sand.u32 %s34, 1
        %s311 = scalar_lea.sflag [#allocation4], %s310
        %s312 = sand.u32 %s34, 1
        %s313 = smul.addr %s312, 32
        %s314 = scalar_lea.vmem [#allocation3], %s313
        %p315 = pneg %p47
        %p316 = pneg %p44
        %p317 = pneg %p68
        %p318 = pneg %p65
        %p319 = pneg %p89
        %p320 = pneg %p86
        %p321 = pneg %p110
        %p322 = pneg %p107
        %p323 = pneg %p131
        %p324 = pneg %p128
        %p325 = pneg %p152
        %p326 = pneg %p149
        %p327 = pneg %p173
        %p328 = pneg %p170
        %p329 = pneg %p194
        %p330 = pneg %p191
        %p331 = pneg %p220
        %p332 = pneg %p217
        %s333 = sand.u32 %s207, 1
        %s334 = scalar_lea.sflag [#allocation5], %s333
        %s335 = sand.u32 %s207, 1
        %s336 = smul.addr %s335, 32
        %s337 = scalar_lea.vmem [#allocation8], %s336
        %s338 = smul.u32 2, %s26
        %s339 = smul.u32 2, %s26
        %v340 = vld [vmem:[%s1] ss:$8 sm:$0x3]
        %s341 = scalar_lea.vmem %s1, 1
        %v342 = vld [vmem:[%s341] ss:$8 sm:$0x3]
        %s343 = scalar_lea.vmem %s1, 2
        %v344 = vld [vmem:[%s343] ss:$8 sm:$0x3]
        %s345 = scalar_lea.vmem %s1, 3
        %v346 = vld [vmem:[%s345] ss:$8 sm:$0x3]
        %s347 = scalar_lea.vmem %s1, 5
        %v348 = vld [vmem:[%s347] ss:$8 sm:$0x3]
        %s349 = scalar_lea.vmem %s1, 6
        %v350 = vld [vmem:[%s349] ss:$8 sm:$0x3]
        %s351 = scalar_lea.vmem %s1, 7
        %v352 = vld [vmem:[%s351] ss:$8 sm:$0x3]
        %s353 = scalar_lea.vmem %s1, 16
        %v354 = vld [vmem:[%s353] ss:$8 sm:$0x3]
        %v355 = vld [vmem:[%s2] sm:$0xff]
        %v356 = vld [vmem:[#allocation6] sm:$0xff]
        %v357 = vld [vmem:[%s4] sm:$0xff]
        %v358 = vld [vmem:[%s5] sm:$0xff]
        %v359 = vld [vmem:[%s6] sm:$0xff]
        %v360 = vld [vmem:[%s7] sm:$0xff]
        %v361 = vld [vmem:[%s301] sm:$0xff]
        %v362 = vld [vmem:[%s301 + $0x8] sm:$0xff]
        %363 = vrot.lane.b32.xlu0 %v361, 17
        %v364 = vpop.permute.xlu0 %363
        %365 = vrot.lane.b32.xlu0 %v362, 17
        %v366 = vpop.permute.xlu0 %365
        %v367 = vlaneseq
        %v368 = vand.u32 %v367, 127
        %vm369 = vcmp.lt.s32.totalorder %v368, 17
        %v370 = vsel %vm369, %v364, %v366
        %v371 = vsel %vm369, %v366, %v364
        %v373 = vlaneseq
        %v374 = vshrl.u32 %v373, 7
        %v375 = vsub.s32 0, %v374
        %v376 = vrot.slane %v340, %v375
        %v377 = vlaneseq
        %v378 = vshrl.u32 %v377, 7
        %v379 = vsub.s32 1, %v378
        %v380 = vrot.slane %v340, %v379
        %v383 = vmul.f32 %v371, %v376
        %v384 = vmul.f32 %v370, %v380
        %385 = vst [vmem:[#allocation2] sm:$0xff] %v383
        %386 = vst [vmem:[#allocation2 + $0x8] sm:$0xff] %v384
        %387 = vrot.lane.b32.xlu0 %v361, 16
        %v388 = vpop.permute.xlu0 %387
        %389 = vrot.lane.b32.xlu0 %v362, 16
        %v390 = vpop.permute.xlu0 %389
        %vm391 = vcmp.lt.s32.totalorder %v368, 16
        %v392 = vsel %vm391, %v388, %v390
        %v393 = vsel %vm391, %v390, %v388
        %v395 = vlaneseq
        %v396 = vshrl.u32 %v395, 7
        %v397 = vsub.s32 0, %v396
        %v398 = vrot.slane %v342, %v397
        %v399 = vlaneseq
        %v400 = vshrl.u32 %v399, 7
        %v401 = vsub.s32 1, %v400
        %v402 = vrot.slane %v342, %v401
        %v405 = vmul.f32 %v393, %v398
        %v406 = vmul.f32 %v392, %v402
        %407 = vst [vmem:[#allocation2 + $0x10] sm:$0xff] %v405
        %408 = vst [vmem:[#allocation2 + $0x18] sm:$0xff] %v406
        %409 = vrot.lane.b32.xlu0 %v361, 15
        %v410 = vpop.permute.xlu0 %409
        %411 = vrot.lane.b32.xlu0 %v362, 15
        %v412 = vpop.permute.xlu0 %411
        %vm413 = vcmp.lt.s32.totalorder %v368, 15
        %v414 = vsel %vm413, %v410, %v412
        %v415 = vsel %vm413, %v412, %v410
        %v417 = vlaneseq
        %v418 = vshrl.u32 %v417, 7
        %v419 = vsub.s32 0, %v418
        %v420 = vrot.slane %v344, %v419
        %v421 = vlaneseq
        %v422 = vshrl.u32 %v421, 7
        %v423 = vsub.s32 1, %v422
        %v424 = vrot.slane %v344, %v423
        %v427 = vmul.f32 %v415, %v420
        %v428 = vmul.f32 %v414, %v424
        %429 = vst [vmem:[#allocation2 + $0x20] sm:$0xff] %v427
        %430 = vst [vmem:[#allocation2 + $0x28] sm:$0xff] %v428
        %431 = vrot.lane.b32.xlu0 %v361, 1
        %v432 = vpop.permute.xlu0 %431
        %433 = vrot.lane.b32.xlu0 %v362, 1
        %v434 = vpop.permute.xlu0 %433
        %vm435 = vcmp.lt.s32.totalorder %v368, 1
        %v436 = vsel %vm435, %v432, %v434
        %v437 = vsel %vm435, %v434, %v432
        %v439 = vlaneseq
        %v440 = vshrl.u32 %v439, 7
        %v441 = vsub.s32 0, %v440
        %v442 = vrot.slane %v346, %v441
        %v443 = vlaneseq
        %v444 = vshrl.u32 %v443, 7
        %v445 = vsub.s32 1, %v444
        %v446 = vrot.slane %v346, %v445
        %v449 = vmul.f32 %v437, %v442
        %v450 = vmul.f32 %v436, %v446
        %451 = vst [vmem:[#allocation2 + $0x30] sm:$0xff] %v449
        %452 = vst [vmem:[#allocation2 + $0x38] sm:$0xff] %v450
        %453 = vst [vmem:[#allocation2 + $0x40] sm:$0xff] %v361
        %454 = vst [vmem:[#allocation2 + $0x48] sm:$0xff] %v362
        %455 = vrot.lane.b32.xlu0 %v361, 127
        %v456 = vpop.permute.xlu0 %455
        %457 = vrot.lane.b32.xlu0 %v362, 127
        %v458 = vpop.permute.xlu0 %457
        %vm459 = vcmp.lt.s32.totalorder %v368, 127
        %v460 = vsel %vm459, %v456, %v458
        %v461 = vsel %vm459, %v458, %v456
        %v463 = vlaneseq
        %v464 = vshrl.u32 %v463, 7
        %v465 = vsub.s32 0, %v464
        %v466 = vrot.slane %v348, %v465
        %v467 = vlaneseq
        %v468 = vshrl.u32 %v467, 7
        %v469 = vsub.s32 1, %v468
        %v470 = vrot.slane %v348, %v469
        %v473 = vmul.f32 %v460, %v466
        %v474 = vmul.f32 %v461, %v470
        %475 = vst [vmem:[#allocation2 + $0x50] sm:$0xff] %v473
        %476 = vst [vmem:[#allocation2 + $0x58] sm:$0xff] %v474
        %477 = vrot.lane.b32.xlu0 %v361, 113
        %v478 = vpop.permute.xlu0 %477
        %479 = vrot.lane.b32.xlu0 %v362, 113
        %v480 = vpop.permute.xlu0 %479
        %vm481 = vcmp.lt.s32.totalorder %v368, 113
        %v482 = vsel %vm481, %v478, %v480
        %v483 = vsel %vm481, %v480, %v478
        %v485 = vlaneseq
        %v486 = vshrl.u32 %v485, 7
        %v487 = vsub.s32 0, %v486
        %v488 = vrot.slane %v350, %v487
        %v489 = vlaneseq
        %v490 = vshrl.u32 %v489, 7
        %v491 = vsub.s32 1, %v490
        %v492 = vrot.slane %v350, %v491
        %v495 = vmul.f32 %v482, %v488
        %v496 = vmul.f32 %v483, %v492
        %497 = vst [vmem:[#allocation2 + $0x60] sm:$0xff] %v495
        %498 = vst [vmem:[#allocation2 + $0x68] sm:$0xff] %v496
        %499 = vrot.lane.b32.xlu0 %v361, 112
        %v500 = vpop.permute.xlu0 %499
        %501 = vrot.lane.b32.xlu0 %v362, 112
        %v502 = vpop.permute.xlu0 %501
        %vm503 = vcmp.lt.s32.totalorder %v368, 112
        %v504 = vsel %vm503, %v500, %v502
        %v505 = vsel %vm503, %v502, %v500
        %v507 = vlaneseq
        %v508 = vshrl.u32 %v507, 7
        %v509 = vsub.s32 0, %v508
        %v510 = vrot.slane %v352, %v509
        %v511 = vlaneseq
        %v512 = vshrl.u32 %v511, 7
        %v513 = vsub.s32 1, %v512
        %v514 = vrot.slane %v352, %v513
        %v517 = vmul.f32 %v504, %v510
        %v518 = vmul.f32 %v505, %v514
        %519 = vst [vmem:[#allocation2 + $0x70] sm:$0xff] %v517
        %520 = vst [vmem:[#allocation2 + $0x78] sm:$0xff] %v518
        %521 = vrot.lane.b32.xlu0 %v361, 111
        %v522 = vpop.permute.xlu0 %521
        %523 = vrot.lane.b32.xlu0 %v362, 111
        %v524 = vpop.permute.xlu0 %523
        %vm525 = vcmp.lt.s32.totalorder %v368, 111
        %v526 = vsel %vm525, %v522, %v524
        %v527 = vsel %vm525, %v524, %v522
        %v529 = vlaneseq
        %v530 = vshrl.u32 %v529, 7
        %v531 = vsub.s32 0, %v530
        %v532 = vrot.slane %v354, %v531
        %v533 = vlaneseq
        %v534 = vshrl.u32 %v533, 7
        %v535 = vsub.s32 1, %v534
        %v536 = vrot.slane %v354, %v535
        %v539 = vmul.f32 %v526, %v532
        %v540 = vmul.f32 %v527, %v536
        %541 = vst [vmem:[#allocation2 + $0x80] sm:$0xff] %v539
        %542 = vst [vmem:[#allocation2 + $0x88] sm:$0xff] %v540
        %v543 = vld [vmem:[#allocation2] sm:$0xff]
        %v544 = vld [vmem:[#allocation2 + $0x8] sm:$0xff]
        %v545 = vld [vmem:[#allocation2 + $0x10] sm:$0xff]
        %v546 = vld [vmem:[#allocation2 + $0x18] sm:$0xff]
        %v547 = vld [vmem:[#allocation2 + $0x20] sm:$0xff]
        %v548 = vld [vmem:[#allocation2 + $0x28] sm:$0xff]
        %v549 = vld [vmem:[#allocation2 + $0x30] sm:$0xff]
        %v550 = vld [vmem:[#allocation2 + $0x38] sm:$0xff]
        %v551 = vld [vmem:[#allocation2 + $0x40] sm:$0xff]
        %v552 = vld [vmem:[#allocation2 + $0x48] sm:$0xff]
        %v553 = vld [vmem:[#allocation2 + $0x50] sm:$0xff]
        %v554 = vld [vmem:[#allocation2 + $0x58] sm:$0xff]
        %v555 = vld [vmem:[#allocation2 + $0x60] sm:$0xff]
        %v556 = vld [vmem:[#allocation2 + $0x68] sm:$0xff]
        %v557 = vld [vmem:[#allocation2 + $0x70] sm:$0xff]
        %v558 = vld [vmem:[#allocation2 + $0x78] sm:$0xff]
        %v559 = vld [vmem:[#allocation2 + $0x80] sm:$0xff]
        %v560 = vld [vmem:[#allocation2 + $0x88] sm:$0xff]
        %vm561 = vcmask 588800
        %v563 = vsel %vm561, %v355, 0
        %565 = vmatprep.subr.mxu0 %v544
        %566 = vmatpush1.msra.mxu0 %v543
        %567 = vmatprep.subr.mxu0 %v546
        %568 = vmatpush1.msra.mxu0 %v545
        %569 = vmatprep.subr.mxu0 %v548
        %570 = vmatpush1.msra.mxu0 %v547
        %571 = vmatprep.subr.mxu0 %v550
        %572 = vmatpush1.msra.mxu0 %v549
        %573 = vmatprep.subr.mxu0 %v552
        %574 = vmatpush1.msra.mxu0 %v551
        %575 = vmatprep.subr.mxu0 %v554
        %576 = vmatpush1.msra.mxu0 %v553
        %577 = vmatprep.subr.mxu0 %v556
        %578 = vmatpush1.msra.mxu0 %v555
        %579 = vmatprep.subr.mxu0 %v558
        %580 = vmatpush1.msra.mxu0 %v557
        %581 = vmatprep.subr.mxu0 %v560
        %582 = vmatpush1.msra.mxu0 %v559
        %583 = vmatprep.subr.mxu0 0.0
        %584 = vmatpush1.msra.mxu0 0.0
        %585 = vmatprep.subr.mxu0 0.0
        %586 = vmatpush1.msra.mxu0 0.0
        %587 = vmatprep.subr.mxu0 0.0
        %588 = vmatpush1.msra.mxu0 0.0
        %589 = vmatprep.subr.mxu0 0.0
        %590 = vmatpush1.msra.mxu0 0.0
        %591 = vmatprep.subr.mxu0 0.0
        %592 = vmatpush1.msra.mxu0 0.0
        %593 = vmatprep.subr.mxu0 0.0
        %594 = vmatpush1.msra.mxu0 0.0
        %595 = vmatprep.subr.mxu0 0.0
        %596 = vmatpush1.msra.mxu0 0.0
        %597 = vmatprep.subr.mxu0 0.0
        %598 = vmatpush1.msra.mxu0 0.0
        %599 = vmatprep.subr.mxu0 0.0
        %600 = vmatpush1.msra.mxu0 0.0
        %601 = vmatprep.subr.mxu0 0.0
        %602 = vmatpush1.msra.mxu0 0.0
        %603 = vmatprep.subr.mxu0 0.0
        %604 = vmatpush1.msra.mxu0 0.0
        %605 = vmatprep.subr.mxu0 0.0
        %606 = vmatpush1.msra.mxu0 0.0
        %607 = vmatprep.subr.mxu0 0.0
        %608 = vmatpush1.msra.mxu0 0.0
        %609 = vmatprep.subr.mxu0 0.0
        %610 = vmatpush1.msra.mxu0 0.0
        %611 = vmatprep.subr.mxu0 0.0
        %612 = vmatpush1.msra.mxu0 0.0
        %613 = vmatprep.subr.mxu0 0.0
        %614 = vmatpush1.msra.mxu0 0.0
        %615 = vmatprep.subr.mxu0 0.0
        %616 = vmatpush1.msra.mxu0 0.0
        %617 = vmatprep.subr.mxu0 0.0
        %618 = vmatpush1.msra.mxu0 0.0
        %619 = vmatprep.subr.mxu0 0.0
        %620 = vmatpush1.msra.mxu0 0.0
        %621 = vmatprep.subr.mxu0 0.0
        %622 = vmatpush1.msra.mxu0 0.0
        %623 = vmatprep.subr.mxu0 0.0
        %624 = vmatpush1.msra.mxu0 0.0
        %625 = vmatprep.subr.mxu0 0.0
        %626 = vmatpush1.msra.mxu0 0.0
        %627 = vmatprep.subr.mxu0 0.0
        %628 = vmatpush1.msra.mxu0 0.0
        %629 = vmatprep.mubr.f32.mxu0 0.0
        %630 = vmatmul.mubr.f32.gmra.mrb[0].mxu0 %v563
        %v631 = vpop.f32.mrb[0].mxu0
        %v632 = vadd.f32 0.0, %v631
        %v633 = vpop.f32.mrb[0].mxu0
        %v634 = vadd.f32 0.0, %v633
        %635 = vdwg.mxu0
        %637 = vset.pattern.permute.xlu0 0
        %638 = vperm.xlu0 %637, %v357
        %v639 = vpop.permute.xlu0 %638
        %v641 = vmul.f32 %v632, %v639
        %v642 = vmul.f32 %v634, %v639
        %644 = vset.pattern.permute.xlu0 0
        %645 = vperm.xlu0 %644, %v358
        %v646 = vpop.permute.xlu0 %645
        %v648 = vadd.f32 %v641, %v646
        %v649 = vadd.f32 %v642, %v646
        %v650 = vmax.f32 %v648, 0.0
        %v651 = vmax.f32 %v649, 0.0
        %652 = vrot.lane.b32.xlu0 %v650, 17
        %v653 = vpop.permute.xlu0 %652
        %654 = vrot.lane.b32.xlu0 %v651, 17
        %v655 = vpop.permute.xlu0 %654
        %v656 = vsel %vm369, %v653, %v655
        %v657 = vsel %vm369, %v655, %v653
        %v658 = vmul.f32 %v657, %v376
        %v659 = vmul.f32 %v656, %v380
        %660 = vst [vmem:[#allocation2] sm:$0xff] %v658
        %661 = vst [vmem:[#allocation2 + $0x8] sm:$0xff] %v659
        %662 = vrot.lane.b32.xlu0 %v650, 16
        %v663 = vpop.permute.xlu0 %662
        %664 = vrot.lane.b32.xlu0 %v651, 16
        %v665 = vpop.permute.xlu0 %664
        %v666 = vsel %vm391, %v663, %v665
        %v667 = vsel %vm391, %v665, %v663
        %v668 = vmul.f32 %v667, %v398
        %v669 = vmul.f32 %v666, %v402
        %670 = vst [vmem:[#allocation2 + $0x10] sm:$0xff] %v668
        %671 = vst [vmem:[#allocation2 + $0x18] sm:$0xff] %v669
        %672 = vrot.lane.b32.xlu0 %v650, 15
        %v673 = vpop.permute.xlu0 %672
        %674 = vrot.lane.b32.xlu0 %v651, 15
        %v675 = vpop.permute.xlu0 %674
        %v676 = vsel %vm413, %v673, %v675
        %v677 = vsel %vm413, %v675, %v673
        %v678 = vmul.f32 %v677, %v420
        %v679 = vmul.f32 %v676, %v424
        %680 = vst [vmem:[#allocation2 + $0x20] sm:$0xff] %v678
        %681 = vst [vmem:[#allocation2 + $0x28] sm:$0xff] %v679
        %682 = vrot.lane.b32.xlu0 %v650, 1
        %v683 = vpop.permute.xlu0 %682
        %684 = vrot.lane.b32.xlu0 %v651, 1
        %v685 = vpop.permute.xlu0 %684
        %v686 = vsel %vm435, %v683, %v685
        %v687 = vsel %vm435, %v685, %v683
        %v688 = vmul.f32 %v687, %v442
        %v689 = vmul.f32 %v686, %v446
        %690 = vst [vmem:[#allocation2 + $0x30] sm:$0xff] %v688
        %691 = vst [vmem:[#allocation2 + $0x38] sm:$0xff] %v689
        %692 = vst [vmem:[#allocation2 + $0x40] sm:$0xff] %v650
        %693 = vst [vmem:[#allocation2 + $0x48] sm:$0xff] %v651
        %694 = vrot.lane.b32.xlu0 %v650, 127
        %v695 = vpop.permute.xlu0 %694
        %696 = vrot.lane.b32.xlu0 %v651, 127
        %v697 = vpop.permute.xlu0 %696
        %v698 = vsel %vm459, %v695, %v697
        %v699 = vsel %vm459, %v697, %v695
        %v700 = vmul.f32 %v698, %v466
        %v701 = vmul.f32 %v699, %v470
        %702 = vst [vmem:[#allocation2 + $0x50] sm:$0xff] %v700
        %703 = vst [vmem:[#allocation2 + $0x58] sm:$0xff] %v701
        %704 = vrot.lane.b32.xlu0 %v650, 113
        %v705 = vpop.permute.xlu0 %704
        %706 = vrot.lane.b32.xlu0 %v651, 113
        %v707 = vpop.permute.xlu0 %706
        %v708 = vsel %vm481, %v705, %v707
        %v709 = vsel %vm481, %v707, %v705
        %v710 = vmul.f32 %v708, %v488
        %v711 = vmul.f32 %v709, %v492
        %712 = vst [vmem:[#allocation2 + $0x60] sm:$0xff] %v710
        %713 = vst [vmem:[#allocation2 + $0x68] sm:$0xff] %v711
        %714 = vrot.lane.b32.xlu0 %v650, 112
        %v715 = vpop.permute.xlu0 %714
        %716 = vrot.lane.b32.xlu0 %v651, 112
        %v717 = vpop.permute.xlu0 %716
        %v718 = vsel %vm503, %v715, %v717
        %v719 = vsel %vm503, %v717, %v715
        %v720 = vmul.f32 %v718, %v510
        %v721 = vmul.f32 %v719, %v514
        %722 = vst [vmem:[#allocation2 + $0x70] sm:$0xff] %v720
        %723 = vst [vmem:[#allocation2 + $0x78] sm:$0xff] %v721
        %724 = vrot.lane.b32.xlu0 %v650, 111
        %v725 = vpop.permute.xlu0 %724
        %726 = vrot.lane.b32.xlu0 %v651, 111
        %v727 = vpop.permute.xlu0 %726
        %v728 = vsel %vm525, %v725, %v727
        %v729 = vsel %vm525, %v727, %v725
        %v730 = vmul.f32 %v728, %v532
        %v731 = vmul.f32 %v729, %v536
        %732 = vst [vmem:[#allocation2 + $0x80] sm:$0xff] %v730
        %733 = vst [vmem:[#allocation2 + $0x88] sm:$0xff] %v731
        %v734 = vld [vmem:[#allocation2] sm:$0xff]
        %v735 = vld [vmem:[#allocation2 + $0x8] sm:$0xff]
        %v736 = vld [vmem:[#allocation2 + $0x10] sm:$0xff]
        %v737 = vld [vmem:[#allocation2 + $0x18] sm:$0xff]
        %v738 = vld [vmem:[#allocation2 + $0x20] sm:$0xff]
        %v739 = vld [vmem:[#allocation2 + $0x28] sm:$0xff]
        %v740 = vld [vmem:[#allocation2 + $0x30] sm:$0xff]
        %v741 = vld [vmem:[#allocation2 + $0x38] sm:$0xff]
        %v742 = vld [vmem:[#allocation2 + $0x40] sm:$0xff]
        %v743 = vld [vmem:[#allocation2 + $0x48] sm:$0xff]
        %v744 = vld [vmem:[#allocation2 + $0x50] sm:$0xff]
        %v745 = vld [vmem:[#allocation2 + $0x58] sm:$0xff]
        %v746 = vld [vmem:[#allocation2 + $0x60] sm:$0xff]
        %v747 = vld [vmem:[#allocation2 + $0x68] sm:$0xff]
        %v748 = vld [vmem:[#allocation2 + $0x70] sm:$0xff]
        %v749 = vld [vmem:[#allocation2 + $0x78] sm:$0xff]
        %v750 = vld [vmem:[#allocation2 + $0x80] sm:$0xff]
        %v751 = vld [vmem:[#allocation2 + $0x88] sm:$0xff]
        %v753 = vsel %vm561, %v356, 0
        %755 = vmatprep.subr.mxu0 %v735
        %756 = vmatpush1.msra.mxu0 %v734
        %757 = vmatprep.subr.mxu0 %v737
        %758 = vmatpush1.msra.mxu0 %v736
        %759 = vmatprep.subr.mxu0 %v739
        %760 = vmatpush1.msra.mxu0 %v738
        %761 = vmatprep.subr.mxu0 %v741
        %762 = vmatpush1.msra.mxu0 %v740
        %763 = vmatprep.subr.mxu0 %v743
        %764 = vmatpush1.msra.mxu0 %v742
        %765 = vmatprep.subr.mxu0 %v745
        %766 = vmatpush1.msra.mxu0 %v744
        %767 = vmatprep.subr.mxu0 %v747
        %768 = vmatpush1.msra.mxu0 %v746
        %769 = vmatprep.subr.mxu0 %v749
        %770 = vmatpush1.msra.mxu0 %v748
        %771 = vmatprep.subr.mxu0 %v751
        %772 = vmatpush1.msra.mxu0 %v750
        %773 = vmatprep.subr.mxu0 0.0
        %774 = vmatpush1.msra.mxu0 0.0
        %775 = vmatprep.subr.mxu0 0.0
        %776 = vmatpush1.msra.mxu0 0.0
        %777 = vmatprep.subr.mxu0 0.0
        %778 = vmatpush1.msra.mxu0 0.0
        %779 = vmatprep.subr.mxu0 0.0
        %780 = vmatpush1.msra.mxu0 0.0
        %781 = vmatprep.subr.mxu0 0.0
        %782 = vmatpush1.msra.mxu0 0.0
        %783 = vmatprep.subr.mxu0 0.0
        %784 = vmatpush1.msra.mxu0 0.0
        %785 = vmatprep.subr.mxu0 0.0
        %786 = vmatpush1.msra.mxu0 0.0
        %787 = vmatprep.subr.mxu0 0.0
        %788 = vmatpush1.msra.mxu0 0.0
        %789 = vmatprep.subr.mxu0 0.0
        %790 = vmatpush1.msra.mxu0 0.0
        %791 = vmatprep.subr.mxu0 0.0
        %792 = vmatpush1.msra.mxu0 0.0
        %793 = vmatprep.subr.mxu0 0.0
        %794 = vmatpush1.msra.mxu0 0.0
        %795 = vmatprep.subr.mxu0 0.0
        %796 = vmatpush1.msra.mxu0 0.0
        %797 = vmatprep.subr.mxu0 0.0
        %798 = vmatpush1.msra.mxu0 0.0
        %799 = vmatprep.subr.mxu0 0.0
        %800 = vmatpush1.msra.mxu0 0.0
        %801 = vmatprep.subr.mxu0 0.0
        %802 = vmatpush1.msra.mxu0 0.0
        %803 = vmatprep.subr.mxu0 0.0
        %804 = vmatpush1.msra.mxu0 0.0
        %805 = vmatprep.subr.mxu0 0.0
        %806 = vmatpush1.msra.mxu0 0.0
        %807 = vmatprep.subr.mxu0 0.0
        %808 = vmatpush1.msra.mxu0 0.0
        %809 = vmatprep.subr.mxu0 0.0
        %810 = vmatpush1.msra.mxu0 0.0
        %811 = vmatprep.subr.mxu0 0.0
        %812 = vmatpush1.msra.mxu0 0.0
        %813 = vmatprep.subr.mxu0 0.0
        %814 = vmatpush1.msra.mxu0 0.0
        %815 = vmatprep.subr.mxu0 0.0
        %816 = vmatpush1.msra.mxu0 0.0
        %817 = vmatprep.subr.mxu0 0.0
        %818 = vmatpush1.msra.mxu0 0.0
        %819 = vmatprep.mubr.f32.mxu0 0.0
        %820 = vmatmul.mubr.f32.gmra.mrb[0].mxu0 %v753
        %v821 = vpop.f32.mrb[0].mxu0
        %v822 = vadd.f32 0.0, %v821
        %v823 = vpop.f32.mrb[0].mxu0
        %v824 = vadd.f32 0.0, %v823
        %825 = vdwg.mxu0
        %827 = vset.pattern.permute.xlu0 0
        %828 = vperm.xlu0 %827, %v359
        %v829 = vpop.permute.xlu0 %828
        %v831 = vmul.f32 %v822, %v829
        %v832 = vmul.f32 %v824, %v829
        %834 = vset.pattern.permute.xlu0 0
        %835 = vperm.xlu0 %834, %v360
        %v836 = vpop.permute.xlu0 %835
        %v838 = vadd.f32 %v831, %v836
        %v839 = vadd.f32 %v832, %v836
        %v840 = vmax.f32 %v838, 0.0
        %v841 = vmax.f32 %v839, 0.0
        %842 = vst [vmem:[%s337] sm:$0xff] %v840
        %843 = vst [vmem:[%s337 + $0x8] sm:$0xff] %v841
        %s844 = scalar_lea.vmem %s301, 16 [#allocation3]
        %v845 = vld [vmem:[%s844] sm:$0xff]
        %v846 = vld [vmem:[%s844 + $0x8] sm:$0xff]
        %847 = vrot.lane.b32.xlu0 %v845, 17
        %v848 = vpop.permute.xlu0 %847
        %849 = vrot.lane.b32.xlu0 %v846, 17
        %v850 = vpop.permute.xlu0 %849
        %v851 = vsel %vm369, %v848, %v850
        %v852 = vsel %vm369, %v850, %v848
        %v853 = vmul.f32 %v852, %v376
        %v854 = vmul.f32 %v851, %v380
        %855 = vst [vmem:[#allocation2] sm:$0xff] %v853
        %856 = vst [vmem:[#allocation2 + $0x8] sm:$0xff] %v854
        %857 = vrot.lane.b32.xlu0 %v845, 16
        %v858 = vpop.permute.xlu0 %857
        %859 = vrot.lane.b32.xlu0 %v846, 16
        %v860 = vpop.permute.xlu0 %859
        %v861 = vsel %vm391, %v858, %v860
        %v862 = vsel %vm391, %v860, %v858
        %v863 = vmul.f32 %v862, %v398
        %v864 = vmul.f32 %v861, %v402
        %865 = vst [vmem:[#allocation2 + $0x10] sm:$0xff] %v863
        %866 = vst [vmem:[#allocation2 + $0x18] sm:$0xff] %v864
        %867 = vrot.lane.b32.xlu0 %v845, 15
        %v868 = vpop.permute.xlu0 %867
        %869 = vrot.lane.b32.xlu0 %v846, 15
        %v870 = vpop.permute.xlu0 %869
        %v871 = vsel %vm413, %v868, %v870
        %v872 = vsel %vm413, %v870, %v868
        %v873 = vmul.f32 %v872, %v420
        %v874 = vmul.f32 %v871, %v424
        %875 = vst [vmem:[#allocation2 + $0x20] sm:$0xff] %v873
        %876 = vst [vmem:[#allocation2 + $0x28] sm:$0xff] %v874
        %877 = vrot.lane.b32.xlu0 %v845, 1
        %v878 = vpop.permute.xlu0 %877
        %879 = vrot.lane.b32.xlu0 %v846, 1
        %v880 = vpop.permute.xlu0 %879
        %v881 = vsel %vm435, %v878, %v880
        %v882 = vsel %vm435, %v880, %v878
        %v883 = vmul.f32 %v882, %v442
        %v884 = vmul.f32 %v881, %v446
        %885 = vst [vmem:[#allocation2 + $0x30] sm:$0xff] %v883
        %886 = vst [vmem:[#allocation2 + $0x38] sm:$0xff] %v884
        %887 = vst [vmem:[#allocation2 + $0x40] sm:$0xff] %v845
        %888 = vst [vmem:[#allocation2 + $0x48] sm:$0xff] %v846
        %889 = vrot.lane.b32.xlu0 %v845, 127
        %v890 = vpop.permute.xlu0 %889
        %891 = vrot.lane.b32.xlu0 %v846, 127
        %v892 = vpop.permute.xlu0 %891
        %v893 = vsel %vm459, %v890, %v892
        %v894 = vsel %vm459, %v892, %v890
        %v895 = vmul.f32 %v893, %v466
        %v896 = vmul.f32 %v894, %v470
        %897 = vst [vmem:[#allocation2 + $0x50] sm:$0xff] %v895
        %898 = vst [vmem:[#allocation2 + $0x58] sm:$0xff] %v896
        %899 = vrot.lane.b32.xlu0 %v845, 113
        %v900 = vpop.permute.xlu0 %899
        %901 = vrot.lane.b32.xlu0 %v846, 113
        %v902 = vpop.permute.xlu0 %901
        %v903 = vsel %vm481, %v900, %v902
        %v904 = vsel %vm481, %v902, %v900
        %v905 = vmul.f32 %v903, %v488
        %v906 = vmul.f32 %v904, %v492
        %907 = vst [vmem:[#allocation2 + $0x60] sm:$0xff] %v905
        %908 = vst [vmem:[#allocation2 + $0x68] sm:$0xff] %v906
        %909 = vrot.lane.b32.xlu0 %v845, 112
        %v910 = vpop.permute.xlu0 %909
        %911 = vrot.lane.b32.xlu0 %v846, 112
        %v912 = vpop.permute.xlu0 %911
        %v913 = vsel %vm503, %v910, %v912
        %v914 = vsel %vm503, %v912, %v910
        %v915 = vmul.f32 %v913, %v510
        %v916 = vmul.f32 %v914, %v514
        %917 = vst [vmem:[#allocation2 + $0x70] sm:$0xff] %v915
        %918 = vst [vmem:[#allocation2 + $0x78] sm:$0xff] %v916
        %919 = vrot.lane.b32.xlu0 %v845, 111
        %v920 = vpop.permute.xlu0 %919
        %921 = vrot.lane.b32.xlu0 %v846, 111
        %v922 = vpop.permute.xlu0 %921
        %v923 = vsel %vm525, %v920, %v922
        %v924 = vsel %vm525, %v922, %v920
        %v925 = vmul.f32 %v923, %v532
        %v926 = vmul.f32 %v924, %v536
        %927 = vst [vmem:[#allocation2 + $0x80] sm:$0xff] %v925
        %928 = vst [vmem:[#allocation2 + $0x88] sm:$0xff] %v926
        %v929 = vld [vmem:[#allocation2] sm:$0xff]
        %v930 = vld [vmem:[#allocation2 + $0x8] sm:$0xff]
        %v931 = vld [vmem:[#allocation2 + $0x10] sm:$0xff]
        %v932 = vld [vmem:[#allocation2 + $0x18] sm:$0xff]
        %v933 = vld [vmem:[#allocation2 + $0x20] sm:$0xff]
        %v934 = vld [vmem:[#allocation2 + $0x28] sm:$0xff]
        %v935 = vld [vmem:[#allocation2 + $0x30] sm:$0xff]
        %v936 = vld [vmem:[#allocation2 + $0x38] sm:$0xff]
        %v937 = vld [vmem:[#allocation2 + $0x40] sm:$0xff]
        %v938 = vld [vmem:[#allocation2 + $0x48] sm:$0xff]
        %v939 = vld [vmem:[#allocation2 + $0x50] sm:$0xff]
        %v940 = vld [vmem:[#allocation2 + $0x58] sm:$0xff]
        %v941 = vld [vmem:[#allocation2 + $0x60] sm:$0xff]
        %v942 = vld [vmem:[#allocation2 + $0x68] sm:$0xff]
        %v943 = vld [vmem:[#allocation2 + $0x70] sm:$0xff]
        %v944 = vld [vmem:[#allocation2 + $0x78] sm:$0xff]
        %v945 = vld [vmem:[#allocation2 + $0x80] sm:$0xff]
        %v946 = vld [vmem:[#allocation2 + $0x88] sm:$0xff]
        %947 = vmatprep.subr.mxu0 %v930
        %948 = vmatpush1.msra.mxu0 %v929
        %949 = vmatprep.subr.mxu0 %v932
        %950 = vmatpush1.msra.mxu0 %v931
        %951 = vmatprep.subr.mxu0 %v934
        %952 = vmatpush1.msra.mxu0 %v933
        %953 = vmatprep.subr.mxu0 %v936
        %954 = vmatpush1.msra.mxu0 %v935
        %955 = vmatprep.subr.mxu0 %v938
        %956 = vmatpush1.msra.mxu0 %v937
        %957 = vmatprep.subr.mxu0 %v940
        %958 = vmatpush1.msra.mxu0 %v939
        %959 = vmatprep.subr.mxu0 %v942
        %960 = vmatpush1.msra.mxu0 %v941
        %961 = vmatprep.subr.mxu0 %v944
        %962 = vmatpush1.msra.mxu0 %v943
        %963 = vmatprep.subr.mxu0 %v946
        %964 = vmatpush1.msra.mxu0 %v945
        %965 = vmatprep.subr.mxu0 0.0
        %966 = vmatpush1.msra.mxu0 0.0
        %967 = vmatprep.subr.mxu0 0.0
        %968 = vmatpush1.msra.mxu0 0.0
        %969 = vmatprep.subr.mxu0 0.0
        %970 = vmatpush1.msra.mxu0 0.0
        %971 = vmatprep.subr.mxu0 0.0
        %972 = vmatpush1.msra.mxu0 0.0
        %973 = vmatprep.subr.mxu0 0.0
        %974 = vmatpush1.msra.mxu0 0.0
        %975 = vmatprep.subr.mxu0 0.0
        %976 = vmatpush1.msra.mxu0 0.0
        %977 = vmatprep.subr.mxu0 0.0
        %978 = vmatpush1.msra.mxu0 0.0
        %979 = vmatprep.subr.mxu0 0.0
        %980 = vmatpush1.msra.mxu0 0.0
        %981 = vmatprep.subr.mxu0 0.0
        %982 = vmatpush1.msra.mxu0 0.0
        %983 = vmatprep.subr.mxu0 0.0
        %984 = vmatpush1.msra.mxu0 0.0
        %985 = vmatprep.subr.mxu0 0.0
        %986 = vmatpush1.msra.mxu0 0.0
        %987 = vmatprep.subr.mxu0 0.0
        %988 = vmatpush1.msra.mxu0 0.0
        %989 = vmatprep.subr.mxu0 0.0
        %990 = vmatpush1.msra.mxu0 0.0
        %991 = vmatprep.subr.mxu0 0.0
        %992 = vmatpush1.msra.mxu0 0.0
        %993 = vmatprep.subr.mxu0 0.0
        %994 = vmatpush1.msra.mxu0 0.0
        %995 = vmatprep.subr.mxu0 0.0
        %996 = vmatpush1.msra.mxu0 0.0
        %997 = vmatprep.subr.mxu0 0.0
        %998 = vmatpush1.msra.mxu0 0.0
        %999 = vmatprep.subr.mxu0 0.0
        %1000 = vmatpush1.msra.mxu0 0.0
        %1001 = vmatprep.subr.mxu0 0.0
        %1002 = vmatpush1.msra.mxu0 0.0
        %1003 = vmatprep.subr.mxu0 0.0
        %1004 = vmatpush1.msra.mxu0 0.0
        %1005 = vmatprep.subr.mxu0 0.0
        %1006 = vmatpush1.msra.mxu0 0.0
        %1007 = vmatprep.subr.mxu0 0.0
        %1008 = vmatpush1.msra.mxu0 0.0
        %1009 = vmatprep.subr.mxu0 0.0
        %1010 = vmatpush1.msra.mxu0 0.0
        %1011 = vmatprep.mubr.f32.mxu0 0.0
        %1012 = vmatmul.mubr.f32.gmra.mrb[0].mxu0 %v563
        %v1013 = vpop.f32.mrb[0].mxu0
        %v1014 = vadd.f32 0.0, %v1013
        %v1015 = vpop.f32.mrb[0].mxu0
        %v1016 = vadd.f32 0.0, %v1015
        %1017 = vdwg.mxu0
        %v1018 = vmul.f32 %v1014, %v639
        %v1019 = vmul.f32 %v1016, %v639
        %v1020 = vadd.f32 %v1018, %v646
        %v1021 = vadd.f32 %v1019, %v646
        %v1022 = vmax.f32 %v1020, 0.0
        %v1023 = vmax.f32 %v1021, 0.0
        %1024 = vrot.lane.b32.xlu0 %v1022, 17
        %v1025 = vpop.permute.xlu0 %1024
        %1026 = vrot.lane.b32.xlu0 %v1023, 17
        %v1027 = vpop.permute.xlu0 %1026
        %v1028 = vsel %vm369, %v1025, %v1027
        %v1029 = vsel %vm369, %v1027, %v1025
        %v1030 = vmul.f32 %v1029, %v376
        %v1031 = vmul.f32 %v1028, %v380
        %1032 = vst [vmem:[#allocation2] sm:$0xff] %v1030
        %1033 = vst [vmem:[#allocation2 + $0x8] sm:$0xff] %v1031
        %1034 = vrot.lane.b32.xlu0 %v1022, 16
        %v1035 = vpop.permute.xlu0 %1034
        %1036 = vrot.lane.b32.xlu0 %v1023, 16
        %v1037 = vpop.permute.xlu0 %1036
        %v1038 = vsel %vm391, %v1035, %v1037
        %v1039 = vsel %vm391, %v1037, %v1035
        %v1040 = vmul.f32 %v1039, %v398
        %v1041 = vmul.f32 %v1038, %v402
        %1042 = vst [vmem:[#allocation2 + $0x10] sm:$0xff] %v1040
        %1043 = vst [vmem:[#allocation2 + $0x18] sm:$0xff] %v1041
        %1044 = vrot.lane.b32.xlu0 %v1022, 15
        %v1045 = vpop.permute.xlu0 %1044
        %1046 = vrot.lane.b32.xlu0 %v1023, 15
        %v1047 = vpop.permute.xlu0 %1046
        %v1048 = vsel %vm413, %v1045, %v1047
        %v1049 = vsel %vm413, %v1047, %v1045
        %v1050 = vmul.f32 %v1049, %v420
        %v1051 = vmul.f32 %v1048, %v424
        %1052 = vst [vmem:[#allocation2 + $0x20] sm:$0xff] %v1050
        %1053 = vst [vmem:[#allocation2 + $0x28] sm:$0xff] %v1051
        %1054 = vrot.lane.b32.xlu0 %v1022, 1
        %v1055 = vpop.permute.xlu0 %1054
        %1056 = vrot.lane.b32.xlu0 %v1023, 1
        %v1057 = vpop.permute.xlu0 %1056
        %v1058 = vsel %vm435, %v1055, %v1057
        %v1059 = vsel %vm435, %v1057, %v1055
        %v1060 = vmul.f32 %v1059, %v442
        %v1061 = vmul.f32 %v1058, %v446
        %1062 = vst [vmem:[#allocation2 + $0x30] sm:$0xff] %v1060
        %1063 = vst [vmem:[#allocation2 + $0x38] sm:$0xff] %v1061
        %1064 = vst [vmem:[#allocation2 + $0x40] sm:$0xff] %v1022
        %1065 = vst [vmem:[#allocation2 + $0x48] sm:$0xff] %v1023
        %1066 = vrot.lane.b32.xlu0 %v1022, 127
        %v1067 = vpop.permute.xlu0 %1066
        %1068 = vrot.lane.b32.xlu0 %v1023, 127
        %v1069 = vpop.permute.xlu0 %1068
        %v1070 = vsel %vm459, %v1067, %v1069
        %v1071 = vsel %vm459, %v1069, %v1067
        %v1072 = vmul.f32 %v1070, %v466
        %v1073 = vmul.f32 %v1071, %v470
        %1074 = vst [vmem:[#allocation2 + $0x50] sm:$0xff] %v1072
        %1075 = vst [vmem:[#allocation2 + $0x58] sm:$0xff] %v1073
        %1076 = vrot.lane.b32.xlu0 %v1022, 113
        %v1077 = vpop.permute.xlu0 %1076
        %1078 = vrot.lane.b32.xlu0 %v1023, 113
        %v1079 = vpop.permute.xlu0 %1078
        %v1080 = vsel %vm481, %v1077, %v1079
        %v1081 = vsel %vm481, %v1079, %v1077
        %v1082 = vmul.f32 %v1080, %v488
        %v1083 = vmul.f32 %v1081, %v492
        %1084 = vst [vmem:[#allocation2 + $0x60] sm:$0xff] %v1082
        %1085 = vst [vmem:[#allocation2 + $0x68] sm:$0xff] %v1083
        %1086 = vrot.lane.b32.xlu0 %v1022, 112
        %v1087 = vpop.permute.xlu0 %1086
        %1088 = vrot.lane.b32.xlu0 %v1023, 112
        %v1089 = vpop.permute.xlu0 %1088
        %v1090 = vsel %vm503, %v1087, %v1089
        %v1091 = vsel %vm503, %v1089, %v1087
        %v1092 = vmul.f32 %v1090, %v510
        %v1093 = vmul.f32 %v1091, %v514
        %1094 = vst [vmem:[#allocation2 + $0x70] sm:$0xff] %v1092
        %1095 = vst [vmem:[#allocation2 + $0x78] sm:$0xff] %v1093
        %1096 = vrot.lane.b32.xlu0 %v1022, 111
        %v1097 = vpop.permute.xlu0 %1096
        %1098 = vrot.lane.b32.xlu0 %v1023, 111
        %v1099 = vpop.permute.xlu0 %1098
        %v1100 = vsel %vm525, %v1097, %v1099
        %v1101 = vsel %vm525, %v1099, %v1097
        %v1102 = vmul.f32 %v1100, %v532
        %v1103 = vmul.f32 %v1101, %v536
        %1104 = vst [vmem:[#allocation2 + $0x80] sm:$0xff] %v1102
        %1105 = vst [vmem:[#allocation2 + $0x88] sm:$0xff] %v1103
        %v1106 = vld [vmem:[#allocation2] sm:$0xff]
        %v1107 = vld [vmem:[#allocation2 + $0x8] sm:$0xff]
        %v1108 = vld [vmem:[#allocation2 + $0x10] sm:$0xff]
        %v1109 = vld [vmem:[#allocation2 + $0x18] sm:$0xff]
        %v1110 = vld [vmem:[#allocation2 + $0x20] sm:$0xff]
        %v1111 = vld [vmem:[#allocation2 + $0x28] sm:$0xff]
        %v1112 = vld [vmem:[#allocation2 + $0x30] sm:$0xff]
        %v1113 = vld [vmem:[#allocation2 + $0x38] sm:$0xff]
        %v1114 = vld [vmem:[#allocation2 + $0x40] sm:$0xff]
        %v1115 = vld [vmem:[#allocation2 + $0x48] sm:$0xff]
        %v1116 = vld [vmem:[#allocation2 + $0x50] sm:$0xff]
        %v1117 = vld [vmem:[#allocation2 + $0x58] sm:$0xff]
        %v1118 = vld [vmem:[#allocation2 + $0x60] sm:$0xff]
        %v1119 = vld [vmem:[#allocation2 + $0x68] sm:$0xff]
        %v1120 = vld [vmem:[#allocation2 + $0x70] sm:$0xff]
        %v1121 = vld [vmem:[#allocation2 + $0x78] sm:$0xff]
        %v1122 = vld [vmem:[#allocation2 + $0x80] sm:$0xff]
        %v1123 = vld [vmem:[#allocation2 + $0x88] sm:$0xff]
        %1124 = vmatprep.subr.mxu0 %v1107
        %1125 = vmatpush1.msra.mxu0 %v1106
        %1126 = vmatprep.subr.mxu0 %v1109
        %1127 = vmatpush1.msra.mxu0 %v1108
        %1128 = vmatprep.subr.mxu0 %v1111
        %1129 = vmatpush1.msra.mxu0 %v1110
        %1130 = vmatprep.subr.mxu0 %v1113
        %1131 = vmatpush1.msra.mxu0 %v1112
        %1132 = vmatprep.subr.mxu0 %v1115
        %1133 = vmatpush1.msra.mxu0 %v1114
        %1134 = vmatprep.subr.mxu0 %v1117
        %1135 = vmatpush1.msra.mxu0 %v1116
        %1136 = vmatprep.subr.mxu0 %v1119
        %1137 = vmatpush1.msra.mxu0 %v1118
        %1138 = vmatprep.subr.mxu0 %v1121
        %1139 = vmatpush1.msra.mxu0 %v1120
        %1140 = vmatprep.subr.mxu0 %v1123
        %1141 = vmatpush1.msra.mxu0 %v1122
        %1142 = vmatprep.subr.mxu0 0.0
        %1143 = vmatpush1.msra.mxu0 0.0
        %1144 = vmatprep.subr.mxu0 0.0
        %1145 = vmatpush1.msra.mxu0 0.0
        %1146 = vmatprep.subr.mxu0 0.0
        %1147 = vmatpush1.msra.mxu0 0.0
        %1148 = vmatprep.subr.mxu0 0.0
        %1149 = vmatpush1.msra.mxu0 0.0
        %1150 = vmatprep.subr.mxu0 0.0
        %1151 = vmatpush1.msra.mxu0 0.0
        %1152 = vmatprep.subr.mxu0 0.0
        %1153 = vmatpush1.msra.mxu0 0.0
        %1154 = vmatprep.subr.mxu0 0.0
        %1155 = vmatpush1.msra.mxu0 0.0
        %1156 = vmatprep.subr.mxu0 0.0
        %1157 = vmatpush1.msra.mxu0 0.0
        %1158 = vmatprep.subr.mxu0 0.0
        %1159 = vmatpush1.msra.mxu0 0.0
        %1160 = vmatprep.subr.mxu0 0.0
        %1161 = vmatpush1.msra.mxu0 0.0
        %1162 = vmatprep.subr.mxu0 0.0
        %1163 = vmatpush1.msra.mxu0 0.0
        %1164 = vmatprep.subr.mxu0 0.0
        %1165 = vmatpush1.msra.mxu0 0.0
        %1166 = vmatprep.subr.mxu0 0.0
        %1167 = vmatpush1.msra.mxu0 0.0
        %1168 = vmatprep.subr.mxu0 0.0
        %1169 = vmatpush1.msra.mxu0 0.0
        %1170 = vmatprep.subr.mxu0 0.0
        %1171 = vmatpush1.msra.mxu0 0.0
        %1172 = vmatprep.subr.mxu0 0.0
        %1173 = vmatpush1.msra.mxu0 0.0
        %1174 = vmatprep.subr.mxu0 0.0
        %1175 = vmatpush1.msra.mxu0 0.0
        %1176 = vmatprep.subr.mxu0 0.0
        %1177 = vmatpush1.msra.mxu0 0.0
        %1178 = vmatprep.subr.mxu0 0.0
        %1179 = vmatpush1.msra.mxu0 0.0
        %1180 = vmatprep.subr.mxu0 0.0
        %1181 = vmatpush1.msra.mxu0 0.0
        %1182 = vmatprep.subr.mxu0 0.0
        %1183 = vmatpush1.msra.mxu0 0.0
        %1184 = vmatprep.subr.mxu0 0.0
        %1185 = vmatpush1.msra.mxu0 0.0
        %1186 = vmatprep.subr.mxu0 0.0
        %1187 = vmatpush1.msra.mxu0 0.0
        %1188 = vmatprep.mubr.f32.mxu0 0.0
        %1189 = vmatmul.mubr.f32.gmra.mrb[0].mxu0 %v753
        %v1190 = vpop.f32.mrb[0].mxu0
        %v1191 = vadd.f32 0.0, %v1190
        %v1192 = vpop.f32.mrb[0].mxu0
        %v1193 = vadd.f32 0.0, %v1192
        %1194 = vdwg.mxu0
        %v1195 = vmul.f32 %v1191, %v829
        %v1196 = vmul.f32 %v1193, %v829
        %v1197 = vadd.f32 %v1195, %v836
        %v1198 = vadd.f32 %v1196, %v836
        %v1199 = vmax.f32 %v1197, 0.0
        %v1200 = vmax.f32 %v1198, 0.0
        %s1201 = scalar_lea.vmem %s337, 16 [#allocation8]
        %1202 = vst [vmem:[%s1201] sm:$0xff] %v1199
        %1203 = vst [vmem:[%s1201 + $0x8] sm:$0xff] %v1200
        %s1204 = sand.u32 %s207, 1
        %s1205 = scalar_lea.sflag [#allocation5], %s1204
        %s1206 = sand.u32 %s207, 1
        %s1207 = smul.addr %s1206, 32
        %s1208 = scalar_lea.vmem [#allocation8], %s1207
        // Predicated region
        $region61: #{tpu_custom_call.1} parent=51 // pred_check
          %p1209 = pneg %p217
        $region62: #{tpu_custom_call.1} parent=51 // pred_check_branch
          %1211 = sbr.rel (%p1209) target = $region64
        $region63: #{tpu_custom_call.1} parent=51 // pred_region
          %s1212 = smul.u32 2, %s26
          %s1214 = ssub.s32 512, 512
          %1215 = vsyncadd %s1205, %s1214
          %s1216 = smul.addr %s1212, 2
          %s1217 = smul.addr %s1216, 128
          %s1218 = scalar_lea.hbm %s8, %s1217
          %s1219 = sshll.u32 %s1208, 4
          %s1220 = int_to_ptr.vmem [resolvable:$true] %s1219
          %1225 = dma.vmem_to_hbm [thread:$0]  %s1220, 512, %s1218, %s1205, 256, 256, 16
        $region64: #{tpu_custom_call.1} parent=51 // pred_fallthru
          _
      $region52: #{tpu_custom_call.1} parent=5 // pred_fallthru
        _
      %p1226 = scmp.le.s32.totalorder 2, %s21
      // Predicated region
      $region65: #{tpu_custom_call.1} parent=5 // pred_check
        %p1227 = pneg %p1226
      $region66: #{tpu_custom_call.1} parent=5 // pred_check_branch
        %1229 = sbr.rel (%p1227) target = $region68
      $region67: #{tpu_custom_call.1} parent=5 // pred_region
        %s1230 = ssub.s32 %s21, 2
        // Predicated region
        $region69: #{tpu_custom_call.1} parent=67 // pred_check
          %p1231 = pneg %p223
        $region70: #{tpu_custom_call.1} parent=67 // pred_check_branch
          %1233 = sbr.rel (%p1231) target = $region72
        $region71: #{tpu_custom_call.1} parent=67 // pred_region
          %s1234 = sand.u32 %s208, 1
          %s1235 = scalar_lea.sflag [#allocation5], %s1234
          %s1236 = sand.u32 %s208, 1
          %s1237 = smul.addr %s1236, 32
          %s1238 = scalar_lea.vmem [#allocation8], %s1237
          %1239 = dma.done %s1235, 512
        $region72: #{tpu_custom_call.1} parent=67 // pred_fallthru
          _
      $region68: #{tpu_custom_call.1} parent=5 // pred_fallthru
        _
    $region6: #{tpu_custom_call.1} parent=1 // loop_footer
      %s25 = sadd.s32 1, %s21
    $region7: #{tpu_custom_call.1} parent=1 // loop_footer_branch
      %20 = sbr.rel target = $region3
    $region8: #{tpu_custom_call.1} parent=1 // loop_exit
      _
    %1240 = vsyncpa [#allocation4], 1
    %s1241 = scalar_lea.sflag [#allocation4], 1
    %1242 = vsyncpa %s1241, 1
    %1243 = vsyncpa [#allocation7], 1
    %1244 = vsyncpa [#allocation5], 1
    %s1245 = scalar_lea.sflag [#allocation5], 1
    %1246 = vsyncpa %s1245, 1

</llo_original>
